<compile_context>
chip_gen: v7x
topology: tpu7x:2x2x1
jax: 0.10.0
libtpu: 0.0.40
codegen_flags: <defaults>
</compile_context>

<pallas_src>
import functools

import jax
import jax.numpy as jnp
from jax.experimental import pallas as pl
from jax.experimental.pallas import tpu as pltpu

LANES = 128            # vreg lane width
B_TILE = 8             # sublane tile: batch rows processed per grid step
_N_WEIGHTS = 8         # wi0, wi1, wi2, w_ih, w_hh, wo0, wo1, wo2
_BIAS_OFF = _N_WEIGHTS * LANES   # row offset of the (8,128) bias block


def _ncp_seq_kernel(x_ref, w_ref, o_ref, h_scr, *, seq_len):
    T, BT = seq_len, B_TILE
    f32 = jnp.float32

    def W(i):  # static, 8/128-aligned row-block view of the packed weight buffer
        return w_ref[i * LANES:(i + 1) * LANES, :]

    bias = w_ref[_BIAS_OFF:_BIAS_OFF + 8, :]     # single aligned (8,128) load

    def bvec(j):
        return bias[j:j + 1, :]                  # (1,128) broadcast row (done once)

    x = x_ref[...]                               # (T*8, 128), time-major batch tile

    # ---- encoder MLP for ALL timesteps at once (hoisted out of the recurrence) ----
    e = jnp.tanh(jnp.dot(x, W(0), preferred_element_type=f32) + bvec(0))
    e = jnp.tanh(jnp.dot(e, W(1), preferred_element_type=f32) + bvec(1))
    enc = jnp.dot(e, W(2), preferred_element_type=f32) + bvec(2)

    # input-to-hidden contribution of the RNN cell, also hoisted over all timesteps
    pre = jnp.dot(enc, W(3), preferred_element_type=f32) + bvec(3)   # (T*8, 128)

    # ---- sequential recurrence: only tanh(pre_t + h @ w_hh) on the critical path ----
    whh = W(4)                                   # loaded once, reused every step
    # TODO(synk): could additionally keep whh staged in the MXU across steps via
    #             pltpu.matmul_push_rhs / matmul_acc_lhs to avoid re-pushing the RHS
    #             on every unrolled iteration.
    h = jnp.zeros((BT, LANES), f32)
    for t in range(T):                           # small static T -> fully unrolled
        lo = t * BT                              # BT == 8 -> (8,128)-aligned slices
        h = jnp.tanh(pre[lo:lo + BT, :] +
                     jnp.dot(h, whh, preferred_element_type=f32))
        h_scr[lo:lo + BT, :] = h                 # aligned per-step store; no concat
    # TODO(synk): for large T, switch to lax.fori_loop (writing via pl.ds) to bound
    #             vreg live ranges / code size.

    h_all = h_scr[...]                           # (T*8, 128)

    # ---- decoder MLP for ALL timesteps at once; wo0 is row-padded over the full
    #      hidden state in the wrapper, so no motor-neuron slice is needed here. ----
    d = jnp.tanh(jnp.dot(h_all, W(5), preferred_element_type=f32) + bvec(4))
    d = jnp.tanh(jnp.dot(d, W(6), preferred_element_type=f32) + bvec(5))
    y = jnp.dot(d, W(7), preferred_element_type=f32) + bvec(6)

    o_ref[...] = y.astype(o_ref.dtype)           # single lane-dense 128-wide store


def _pack_weights(params, *, motor_n, state_size):
    """Pack all 15 weight/bias tensors into ONE tile-aligned (8*128+8, 128) f32 buffer
    (zero-padded), so the kernel needs exactly two input DMAs: x and this buffer."""
    f32 = jnp.float32

    def padw(w, row0=0):
        k, n = w.shape
        assert row0 + k <= LANES and n <= LANES, "layer dims must fit one 128x128 tile"
        return jnp.zeros((LANES, LANES), f32).at[row0:row0 + k, :n].set(w.astype(f32))

    # wo0 consumes the FULL hidden state: its rows sit at the motor-neuron slice
    # [state_size - motor_n, state_size); all other rows are zero (math unchanged).
    blocks = [
        padw(params["wi0"]), padw(params["wi1"]), padw(params["wi2"]),
        padw(params["w_ih"]), padw(params["w_hh"]),
        padw(params["wo0"], row0=state_size - motor_n),
        padw(params["wo1"]), padw(params["wo2"]),
    ]
    bias_blk = jnp.zeros((8, LANES), f32)
    for j, name in enumerate(("bi0", "bi1", "bi2", "b_h", "bo0", "bo1", "bo2")):
        b = params[name].reshape(-1).astype(f32)
        bias_blk = bias_blk.at[j, :b.shape[0]].set(b)
    return jnp.concatenate(blocks + [bias_blk], axis=0)          # (1032, 128)


def ncp_sequence_forward(x, params, *, motor_n, state_size, output_dim):
    """x: (B, T, input_dim) float32. Returns (B, T, output_dim)."""
    B, T, in_dim = x.shape
    assert in_dim <= LANES and output_dim <= LANES and state_size <= LANES
    f32 = jnp.float32

    n_btiles = pl.cdiv(B, B_TILE)
    B_pad = n_btiles * B_TILE
    rows = T * B_TILE                                     # rows per batch-tile block

    # time-major packing per batch tile: row g*T*8 + t*8 + b_local; lanes padded to 128
    x_p = jnp.zeros((B_pad, T, LANES), f32).at[:B, :, :in_dim].set(x.astype(f32))
    x_p = (x_p.reshape(n_btiles, B_TILE, T, LANES)
              .transpose(0, 2, 1, 3)
              .reshape(n_btiles * rows, LANES))

    w_buf = _pack_weights(params, motor_n=motor_n, state_size=state_size)

    kernel = functools.partial(_ncp_seq_kernel, seq_len=T)

    y_p = pl.pallas_call(
        kernel,
        out_shape=jax.ShapeDtypeStruct((n_btiles * rows, LANES), f32),
        grid=(n_btiles,),                                 # batch tiles are independent
        in_specs=[
            pl.BlockSpec((rows, LANES), lambda g: (g, 0)),
            pl.BlockSpec(w_buf.shape, lambda g: (0, 0)),  # same block every step (resident)
        ],
        out_specs=pl.BlockSpec((rows, LANES), lambda g: (g, 0)),
        scratch_shapes=[pltpu.VMEM((rows, LANES), f32)],  # per-step hidden states
        compiler_params=pltpu.CompilerParams(
            dimension_semantics=("parallel",),            # megacore-shardable on v7x
            vmem_limit_bytes=32 * 1024 * 1024,
        ),
    )(x_p, w_buf)

    # unpack: strip padded batch rows and padded output lanes
    y = (y_p.reshape(n_btiles, T, B_TILE, LANES)
            .transpose(0, 2, 1, 3)
            .reshape(B_pad, T, LANES))
    return y[:B, :, :output_dim]


def _init_linear(key, in_dim, out_dim, scale=0.1):
    kw, kb = jax.random.split(key)
    w = scale * jax.random.normal(kw, (in_dim, out_dim), dtype=jnp.float32)
    b = scale * jax.random.normal(kb, (1, out_dim), dtype=jnp.float32)
    return w, b


def make_params(key, input_dim, i_mlp, inter_n, motor_n, o_mlp, output_dim, state_size):
    i_sizes = (input_dim,) + i_mlp + (inter_n,)
    o_sizes = (motor_n,) + o_mlp + (output_dim,)
    keys = jax.random.split(key, 8)
    p = {}
    p["wi0"], p["bi0"] = _init_linear(keys[0], i_sizes[0], i_sizes[1])
    p["wi1"], p["bi1"] = _init_linear(keys[1], i_sizes[1], i_sizes[2])
    p["wi2"], p["bi2"] = _init_linear(keys[2], i_sizes[2], i_sizes[3])
    p["w_ih"], p["b_h"] = _init_linear(keys[3], inter_n, state_size)
    p["w_hh"], _ = _init_linear(keys[4], state_size, state_size)
    p["wo0"], p["bo0"] = _init_linear(keys[5], o_sizes[0], o_sizes[1])
    p["wo1"], p["bo1"] = _init_linear(keys[6], o_sizes[1], o_sizes[2])
    p["wo2"], p["bo2"] = _init_linear(keys[7], o_sizes[2], o_sizes[3])
    return p


def reference_forward(x, p, *, motor_n, state_size):
    """Pure-JAX reference (mirrors the PyTorch per-timestep loop)."""
    B, T, _ = x.shape
    h = jnp.zeros((B, state_size), jnp.float32)
    outs = []
    for t in range(T):
        xt = x[:, t]
        e = jnp.tanh(xt @ p["wi0"] + p["bi0"])
        e = jnp.tanh(e @ p["wi1"] + p["bi1"])
        e = e @ p["wi2"] + p["bi2"]
        h = jnp.tanh(e @ p["w_ih"] + h @ p["w_hh"] + p["b_h"])
        m = h[:, -motor_n:]
        d = jnp.tanh(m @ p["wo0"] + p["bo0"])
        d = jnp.tanh(d @ p["wo1"] + p["bo1"])
        outs.append(d @ p["wo2"] + p["bo2"])
    return jnp.stack(outs, axis=1)


if __name__ == "__main__":
    # small shapes consistent with the module's forward
    batch = 2
    seq = 8
    input_dim = 16
    i_mlp = (32, 32)
    inter_n = 16
    motor_n = 8
    o_mlp = (32, 32)
    output_dim = 8
    state_size = inter_n + motor_n  # NCP stand-in: inter + motor neurons

    key = jax.random.PRNGKey(0)
    kx, kp = jax.random.split(key)
    x = jax.random.normal(kx, (batch, seq, input_dim), dtype=jnp.float32)
    params = make_params(kp, input_dim, i_mlp, inter_n, motor_n, o_mlp,
                         output_dim, state_size)

    out = ncp_sequence_forward(
        x, params, motor_n=motor_n, state_size=state_size, output_dim=output_dim
    )
    out = jax.block_until_ready(out)

    ref = reference_forward(x, params, motor_n=motor_n, state_size=state_size)
    assert out.shape == (batch, seq, output_dim)
    assert jnp.allclose(out, ref, atol=1e-5, rtol=1e-5), "mismatch vs JAX reference"

    print("KERNEL_OK")
</pallas_src>

<mosaic_0001>
module attributes {stable_mosaic.version = 11 : i64} {
  func.func @_ncp_seq_kernel(%arg0: i32, %arg1: memref<64x128xf32, #tpu.memory_space<vmem>>, %arg2: memref<1032x128xf32, #tpu.memory_space<vmem>>, %arg3: memref<64x128xf32, #tpu.memory_space<vmem>>, %arg4: memref<64x128xf32, #tpu.memory_space<vmem>>) attributes {dimension_semantics = [#tpu.dimension_semantics<parallel>], iteration_bounds = array<i64: 1>, scalar_prefetch = 0 : i64, scratch_operands = 1 : i64, tpu.core_type = #tpu.core_type<tc>, window_params = [{transform_indices = @transform_0, window_bounds = array<i64: 64, 128>}, {pipeline_mode = #tpu.pipeline_mode<synchronous>, transform_indices = @transform_1, window_bounds = array<i64: 1032, 128>}, {transform_indices = @transform_2, window_bounds = array<i64: 64, 128>}]} {
    %c1024 = arith.constant 1024 : index
    %c0 = arith.constant 0 : index
    %0 = vector.load %arg2[%c1024, %c0] : memref<1032x128xf32, #tpu.memory_space<vmem>>, vector<8x128xf32>
    %c0_0 = arith.constant 0 : index
    %c0_1 = arith.constant 0 : index
    %1 = vector.load %arg1[%c0_0, %c0_1] : memref<64x128xf32, #tpu.memory_space<vmem>>, vector<64x128xf32>
    %c0_2 = arith.constant 0 : index
    %c0_3 = arith.constant 0 : index
    %2 = vector.load %arg2[%c0_2, %c0_3] : memref<1032x128xf32, #tpu.memory_space<vmem>>, vector<128x128xf32>
    %cst = arith.constant dense<0.000000e+00> : vector<64x128xf32>
    %3 = tpu.matmul %1, %2, %cst {dimension_numbers = #tpu.dot_dimension_numbers<[1], [0], [0], [1], [0, 0, 1, 1], [], []>} : vector<64x128xf32>, vector<128x128xf32>, vector<64x128xf32> -> vector<64x128xf32>
    %4 = vector.extract_strided_slice %0 {offsets = [0, 0], sizes = [1, 128], strides = [1, 1]} : vector<8x128xf32> to vector<1x128xf32>
    %5 = vector.broadcast %4 : vector<1x128xf32> to vector<64x128xf32>
    %6 = arith.addf %3, %5 : vector<64x128xf32>
    %7 = math.tanh %6 : vector<64x128xf32>
    %c128 = arith.constant 128 : index
    %c0_4 = arith.constant 0 : index
    %8 = vector.load %arg2[%c128, %c0_4] : memref<1032x128xf32, #tpu.memory_space<vmem>>, vector<128x128xf32>
    %cst_5 = arith.constant dense<0.000000e+00> : vector<64x128xf32>
    %9 = tpu.matmul %7, %8, %cst_5 {dimension_numbers = #tpu.dot_dimension_numbers<[1], [0], [0], [1], [0, 0, 1, 1], [], []>} : vector<64x128xf32>, vector<128x128xf32>, vector<64x128xf32> -> vector<64x128xf32>
    %10 = vector.extract_strided_slice %0 {offsets = [1, 0], sizes = [1, 128], strides = [1, 1]} : vector<8x128xf32> to vector<1x128xf32>
    %11 = vector.broadcast %10 : vector<1x128xf32> to vector<64x128xf32>
    %12 = arith.addf %9, %11 : vector<64x128xf32>
    %13 = math.tanh %12 : vector<64x128xf32>
    %c256 = arith.constant 256 : index
    %c0_6 = arith.constant 0 : index
    %14 = vector.load %arg2[%c256, %c0_6] : memref<1032x128xf32, #tpu.memory_space<vmem>>, vector<128x128xf32>
    %cst_7 = arith.constant dense<0.000000e+00> : vector<64x128xf32>
    %15 = tpu.matmul %13, %14, %cst_7 {dimension_numbers = #tpu.dot_dimension_numbers<[1], [0], [0], [1], [0, 0, 1, 1], [], []>} : vector<64x128xf32>, vector<128x128xf32>, vector<64x128xf32> -> vector<64x128xf32>
    %16 = vector.extract_strided_slice %0 {offsets = [2, 0], sizes = [1, 128], strides = [1, 1]} : vector<8x128xf32> to vector<1x128xf32>
    %17 = vector.broadcast %16 : vector<1x128xf32> to vector<64x128xf32>
    %18 = arith.addf %15, %17 : vector<64x128xf32>
    %c384 = arith.constant 384 : index
    %c0_8 = arith.constant 0 : index
    %19 = vector.load %arg2[%c384, %c0_8] : memref<1032x128xf32, #tpu.memory_space<vmem>>, vector<128x128xf32>
    %cst_9 = arith.constant dense<0.000000e+00> : vector<64x128xf32>
    %20 = tpu.matmul %18, %19, %cst_9 {dimension_numbers = #tpu.dot_dimension_numbers<[1], [0], [0], [1], [0, 0, 1, 1], [], []>} : vector<64x128xf32>, vector<128x128xf32>, vector<64x128xf32> -> vector<64x128xf32>
    %21 = vector.extract_strided_slice %0 {offsets = [3, 0], sizes = [1, 128], strides = [1, 1]} : vector<8x128xf32> to vector<1x128xf32>
    %22 = vector.broadcast %21 : vector<1x128xf32> to vector<64x128xf32>
    %23 = arith.addf %20, %22 : vector<64x128xf32>
    %c512 = arith.constant 512 : index
    %c0_10 = arith.constant 0 : index
    %24 = vector.load %arg2[%c512, %c0_10] : memref<1032x128xf32, #tpu.memory_space<vmem>>, vector<128x128xf32>
    %cst_11 = arith.constant 0.000000e+00 : f32
    %25 = vector.broadcast %cst_11 : f32 to vector<8x128xf32>
    %26 = vector.extract_strided_slice %23 {offsets = [0, 0], sizes = [8, 128], strides = [1, 1]} : vector<64x128xf32> to vector<8x128xf32>
    %cst_12 = arith.constant dense<0.000000e+00> : vector<8x128xf32>
    %27 = tpu.matmul %25, %24, %cst_12 {dimension_numbers = #tpu.dot_dimension_numbers<[1], [0], [0], [1], [0, 0, 1, 1], [], []>} : vector<8x128xf32>, vector<128x128xf32>, vector<8x128xf32> -> vector<8x128xf32>
    %28 = arith.addf %26, %27 : vector<8x128xf32>
    %29 = math.tanh %28 : vector<8x128xf32>
    %c0_13 = arith.constant 0 : index
    %c0_14 = arith.constant 0 : index
    %30 = vector.load %arg4[%c0_13, %c0_14] : memref<64x128xf32, #tpu.memory_space<vmem>>, vector<8x128xf32>
    tpu.vector_store %arg4[%c0_13, %c0_14], %29 {strides = array<i32>} : memref<64x128xf32, #tpu.memory_space<vmem>>, vector<8x128xf32>,
    %31 = vector.extract_strided_slice %23 {offsets = [8, 0], sizes = [8, 128], strides = [1, 1]} : vector<64x128xf32> to vector<8x128xf32>
    %cst_15 = arith.constant dense<0.000000e+00> : vector<8x128xf32>
    %32 = tpu.matmul %29, %24, %cst_15 {dimension_numbers = #tpu.dot_dimension_numbers<[1], [0], [0], [1], [0, 0, 1, 1], [], []>} : vector<8x128xf32>, vector<128x128xf32>, vector<8x128xf32> -> vector<8x128xf32>
    %33 = arith.addf %31, %32 : vector<8x128xf32>
    %34 = math.tanh %33 : vector<8x128xf32>
    %c8 = arith.constant 8 : index
    %c0_16 = arith.constant 0 : index
    %35 = vector.load %arg4[%c8, %c0_16] : memref<64x128xf32, #tpu.memory_space<vmem>>, vector<8x128xf32>
    tpu.vector_store %arg4[%c8, %c0_16], %34 {strides = array<i32>} : memref<64x128xf32, #tpu.memory_space<vmem>>, vector<8x128xf32>,
    %36 = vector.extract_strided_slice %23 {offsets = [16, 0], sizes = [8, 128], strides = [1, 1]} : vector<64x128xf32> to vector<8x128xf32>
    %cst_17 = arith.constant dense<0.000000e+00> : vector<8x128xf32>
    %37 = tpu.matmul %34, %24, %cst_17 {dimension_numbers = #tpu.dot_dimension_numbers<[1], [0], [0], [1], [0, 0, 1, 1], [], []>} : vector<8x128xf32>, vector<128x128xf32>, vector<8x128xf32> -> vector<8x128xf32>
    %38 = arith.addf %36, %37 : vector<8x128xf32>
    %39 = math.tanh %38 : vector<8x128xf32>
    %c16 = arith.constant 16 : index
    %c0_18 = arith.constant 0 : index
    %40 = vector.load %arg4[%c16, %c0_18] : memref<64x128xf32, #tpu.memory_space<vmem>>, vector<8x128xf32>
    tpu.vector_store %arg4[%c16, %c0_18], %39 {strides = array<i32>} : memref<64x128xf32, #tpu.memory_space<vmem>>, vector<8x128xf32>,
    %41 = vector.extract_strided_slice %23 {offsets = [24, 0], sizes = [8, 128], strides = [1, 1]} : vector<64x128xf32> to vector<8x128xf32>
    %cst_19 = arith.constant dense<0.000000e+00> : vector<8x128xf32>
    %42 = tpu.matmul %39, %24, %cst_19 {dimension_numbers = #tpu.dot_dimension_numbers<[1], [0], [0], [1], [0, 0, 1, 1], [], []>} : vector<8x128xf32>, vector<128x128xf32>, vector<8x128xf32> -> vector<8x128xf32>
    %43 = arith.addf %41, %42 : vector<8x128xf32>
    %44 = math.tanh %43 : vector<8x128xf32>
    %c24 = arith.constant 24 : index
    %c0_20 = arith.constant 0 : index
    %45 = vector.load %arg4[%c24, %c0_20] : memref<64x128xf32, #tpu.memory_space<vmem>>, vector<8x128xf32>
    tpu.vector_store %arg4[%c24, %c0_20], %44 {strides = array<i32>} : memref<64x128xf32, #tpu.memory_space<vmem>>, vector<8x128xf32>,
    %46 = vector.extract_strided_slice %23 {offsets = [32, 0], sizes = [8, 128], strides = [1, 1]} : vector<64x128xf32> to vector<8x128xf32>
    %cst_21 = arith.constant dense<0.000000e+00> : vector<8x128xf32>
    %47 = tpu.matmul %44, %24, %cst_21 {dimension_numbers = #tpu.dot_dimension_numbers<[1], [0], [0], [1], [0, 0, 1, 1], [], []>} : vector<8x128xf32>, vector<128x128xf32>, vector<8x128xf32> -> vector<8x128xf32>
    %48 = arith.addf %46, %47 : vector<8x128xf32>
    %49 = math.tanh %48 : vector<8x128xf32>
    %c32 = arith.constant 32 : index
    %c0_22 = arith.constant 0 : index
    %50 = vector.load %arg4[%c32, %c0_22] : memref<64x128xf32, #tpu.memory_space<vmem>>, vector<8x128xf32>
    tpu.vector_store %arg4[%c32, %c0_22], %49 {strides = array<i32>} : memref<64x128xf32, #tpu.memory_space<vmem>>, vector<8x128xf32>,
    %51 = vector.extract_strided_slice %23 {offsets = [40, 0], sizes = [8, 128], strides = [1, 1]} : vector<64x128xf32> to vector<8x128xf32>
    %cst_23 = arith.constant dense<0.000000e+00> : vector<8x128xf32>
    %52 = tpu.matmul %49, %24, %cst_23 {dimension_numbers = #tpu.dot_dimension_numbers<[1], [0], [0], [1], [0, 0, 1, 1], [], []>} : vector<8x128xf32>, vector<128x128xf32>, vector<8x128xf32> -> vector<8x128xf32>
    %53 = arith.addf %51, %52 : vector<8x128xf32>
    %54 = math.tanh %53 : vector<8x128xf32>
    %c40 = arith.constant 40 : index
    %c0_24 = arith.constant 0 : index
    %55 = vector.load %arg4[%c40, %c0_24] : memref<64x128xf32, #tpu.memory_space<vmem>>, vector<8x128xf32>
    tpu.vector_store %arg4[%c40, %c0_24], %54 {strides = array<i32>} : memref<64x128xf32, #tpu.memory_space<vmem>>, vector<8x128xf32>,
    %56 = vector.extract_strided_slice %23 {offsets = [48, 0], sizes = [8, 128], strides = [1, 1]} : vector<64x128xf32> to vector<8x128xf32>
    %cst_25 = arith.constant dense<0.000000e+00> : vector<8x128xf32>
    %57 = tpu.matmul %54, %24, %cst_25 {dimension_numbers = #tpu.dot_dimension_numbers<[1], [0], [0], [1], [0, 0, 1, 1], [], []>} : vector<8x128xf32>, vector<128x128xf32>, vector<8x128xf32> -> vector<8x128xf32>
    %58 = arith.addf %56, %57 : vector<8x128xf32>
    %59 = math.tanh %58 : vector<8x128xf32>
    %c48 = arith.constant 48 : index
    %c0_26 = arith.constant 0 : index
    %60 = vector.load %arg4[%c48, %c0_26] : memref<64x128xf32, #tpu.memory_space<vmem>>, vector<8x128xf32>
    tpu.vector_store %arg4[%c48, %c0_26], %59 {strides = array<i32>} : memref<64x128xf32, #tpu.memory_space<vmem>>, vector<8x128xf32>,
    %61 = vector.extract_strided_slice %23 {offsets = [56, 0], sizes = [8, 128], strides = [1, 1]} : vector<64x128xf32> to vector<8x128xf32>
    %cst_27 = arith.constant dense<0.000000e+00> : vector<8x128xf32>
    %62 = tpu.matmul %59, %24, %cst_27 {dimension_numbers = #tpu.dot_dimension_numbers<[1], [0], [0], [1], [0, 0, 1, 1], [], []>} : vector<8x128xf32>, vector<128x128xf32>, vector<8x128xf32> -> vector<8x128xf32>
    %63 = arith.addf %61, %62 : vector<8x128xf32>
    %64 = math.tanh %63 : vector<8x128xf32>
    %c56 = arith.constant 56 : index
    %c0_28 = arith.constant 0 : index
    %65 = vector.load %arg4[%c56, %c0_28] : memref<64x128xf32, #tpu.memory_space<vmem>>, vector<8x128xf32>
    tpu.vector_store %arg4[%c56, %c0_28], %64 {strides = array<i32>} : memref<64x128xf32, #tpu.memory_space<vmem>>, vector<8x128xf32>,
    %c0_29 = arith.constant 0 : index
    %c0_30 = arith.constant 0 : index
    %66 = vector.load %arg4[%c0_29, %c0_30] : memref<64x128xf32, #tpu.memory_space<vmem>>, vector<64x128xf32>
    %c640 = arith.constant 640 : index
    %c0_31 = arith.constant 0 : index
    %67 = vector.load %arg2[%c640, %c0_31] : memref<1032x128xf32, #tpu.memory_space<vmem>>, vector<128x128xf32>
    %cst_32 = arith.constant dense<0.000000e+00> : vector<64x128xf32>
    %68 = tpu.matmul %66, %67, %cst_32 {dimension_numbers = #tpu.dot_dimension_numbers<[1], [0], [0], [1], [0, 0, 1, 1], [], []>} : vector<64x128xf32>, vector<128x128xf32>, vector<64x128xf32> -> vector<64x128xf32>
    %69 = vector.extract_strided_slice %0 {offsets = [4, 0], sizes = [1, 128], strides = [1, 1]} : vector<8x128xf32> to vector<1x128xf32>
    %70 = vector.broadcast %69 : vector<1x128xf32> to vector<64x128xf32>
    %71 = arith.addf %68, %70 : vector<64x128xf32>
    %72 = math.tanh %71 : vector<64x128xf32>
    %c768 = arith.constant 768 : index
    %c0_33 = arith.constant 0 : index
    %73 = vector.load %arg2[%c768, %c0_33] : memref<1032x128xf32, #tpu.memory_space<vmem>>, vector<128x128xf32>
    %cst_34 = arith.constant dense<0.000000e+00> : vector<64x128xf32>
    %74 = tpu.matmul %72, %73, %cst_34 {dimension_numbers = #tpu.dot_dimension_numbers<[1], [0], [0], [1], [0, 0, 1, 1], [], []>} : vector<64x128xf32>, vector<128x128xf32>, vector<64x128xf32> -> vector<64x128xf32>
    %75 = vector.extract_strided_slice %0 {offsets = [5, 0], sizes = [1, 128], strides = [1, 1]} : vector<8x128xf32> to vector<1x128xf32>
    %76 = vector.broadcast %75 : vector<1x128xf32> to vector<64x128xf32>
    %77 = arith.addf %74, %76 : vector<64x128xf32>
    %78 = math.tanh %77 : vector<64x128xf32>
    %c896 = arith.constant 896 : index
    %c0_35 = arith.constant 0 : index
    %79 = vector.load %arg2[%c896, %c0_35] : memref<1032x128xf32, #tpu.memory_space<vmem>>, vector<128x128xf32>
    %cst_36 = arith.constant dense<0.000000e+00> : vector<64x128xf32>
    %80 = tpu.matmul %78, %79, %cst_36 {dimension_numbers = #tpu.dot_dimension_numbers<[1], [0], [0], [1], [0, 0, 1, 1], [], []>} : vector<64x128xf32>, vector<128x128xf32>, vector<64x128xf32> -> vector<64x128xf32>
    %81 = vector.extract_strided_slice %0 {offsets = [6, 0], sizes = [1, 128], strides = [1, 1]} : vector<8x128xf32> to vector<1x128xf32>
    %82 = vector.broadcast %81 : vector<1x128xf32> to vector<64x128xf32>
    %83 = arith.addf %80, %82 : vector<64x128xf32>
    %c0_37 = arith.constant 0 : index
    %c0_38 = arith.constant 0 : index
    %84 = vector.load %arg3[%c0_37, %c0_38] : memref<64x128xf32, #tpu.memory_space<vmem>>, vector<64x128xf32>
    tpu.vector_store %arg3[%c0_37, %c0_38], %83 {strides = array<i32>} : memref<64x128xf32, #tpu.memory_space<vmem>>, vector<64x128xf32>,
    return
  }
  func.func @transform_0(%arg0: i32) -> (i32, i32) {
    %c0_i32 = arith.constant 0 : i32
    %c0_i32_0 = arith.constant 0 : i32
    return %arg0, %c0_i32 : i32, i32
  }
  func.func @transform_1(%arg0: i32) -> (i32, i32) {
    %c0_i32 = arith.constant 0 : i32
    %c0_i32_0 = arith.constant 0 : i32
    %c0_i32_1 = arith.constant 0 : i32
    return %c0_i32, %c0_i32_0 : i32, i32
  }
  func.func @transform_2(%arg0: i32) -> (i32, i32) {
    %c0_i32 = arith.constant 0 : i32
    %c0_i32_0 = arith.constant 0 : i32
    return %arg0, %c0_i32 : i32, i32
  }
}

</mosaic_0001>

<llo_original>
// kernel: tpu_custom_call.1
$region0: #{tpu_custom_call.1}
  #allocation0 [shape = 'u32[]', space=smem, size = 0x4, offset = 0x4, fixed_abs, tag = 'smem constant byte address 0x4 - core index']
  #allocation1 [shape = 'u32[144,128]{1,0:T(1,128)}', space=vmem, size = 0x12000, scoped, tag = 'internal scratch']
  #allocation2 [shape = 'f32[64,128]{1,0:T(8,128)}', space=vmem, size = 0x8000, scoped, tag = 'scratch operand']
  %s0 = inlined_call_operand.hbm [shape: f32[64,128], index: 0, kind: input, shape index: {}]
  %s1 = inlined_call_operand.hbm [shape: f32[1032,128], index: 1, kind: input, shape index: {}]
  %s2 = inlined_call_operand.hbm [shape: f32[64,128], index: 2, kind: output, shape index: {}]
  %s3 = sld [smem:[#allocation0]]
  $region26: #{tpu_custom_call.1} parent=0
    _
  %s5 = ssub.s32 1, %s3
  %s6 = scalar_select 0, %s5, %s3
  $region1: #{tpu_custom_call.1} parent=0
    #allocation3 [shape = 'u8[32768]{0}', space=vmem, size = 0x8000, scoped, tag = 'input window, operand 0, single buffered']
    #allocation4 [shape = 's32[1]{0}', space=sflag, size = 0x4, scoped, tag = 'scoped memory for tpu_custom_call.1']
    #allocation5 [shape = 's32[1]{0}', space=sflag, size = 0x4, scoped, tag = 'scoped memory for tpu_custom_call.1']
    #allocation6 [shape = 'u8[528384]{0}', space=vmem, size = 0x81000, scoped, tag = 'input window, operand 1, single buffered']
    #allocation7 [shape = 's32[1]{0}', space=sflag, size = 0x4, scoped, tag = 'scoped memory for tpu_custom_call.1']
    #allocation8 [shape = 'u8[32768]{0}', space=vmem, size = 0x8000, scoped, tag = 'output window, operand 0, single buffered']
    %7 = vsyncpa [#allocation4], 0
    %8 = vsyncpa [#allocation7], 0
    %9 = vsyncpa [#allocation5], 0
    // Predicated region
    $region2: #{tpu_custom_call.1} parent=1 // pred_check
      _
    $region3: #{tpu_custom_call.1} parent=1 // pred_check_branch
      %11 = sbr.rel (0) target = $region5
    $region4: #{tpu_custom_call.1} parent=1 // pred_region
      %s13 = ssub.s32 1024, 1024
      %14 = vsyncadd [#allocation4], %s13
      %s15 = sshll.u32 [#allocation3], 4
      %s16 = int_to_ptr.vmem [resolvable:$true] %s15
      %21 = dma.hbm_to_vmem [thread:$0]  %s0, 1024, %s16, [#allocation4], 128, 128, 8
    $region5: #{tpu_custom_call.1} parent=1 // pred_fallthru
      _
    // Predicated region
    $region6: #{tpu_custom_call.1} parent=1 // pred_check
      _
    $region7: #{tpu_custom_call.1} parent=1 // pred_check_branch
      %23 = sbr.rel (0) target = $region9
    $region8: #{tpu_custom_call.1} parent=1 // pred_region
      %s25 = ssub.s32 16512, 16512
      %26 = vsyncadd [#allocation7], %s25
      %s27 = sshll.u32 [#allocation6], 4
      %s28 = int_to_ptr.vmem [resolvable:$true] %s27
      %33 = dma.hbm_to_vmem [thread:$0]  %s1, 16512, %s28, [#allocation7], 128, 128, 8
    $region9: #{tpu_custom_call.1} parent=1 // pred_fallthru
      _
    // Predicated region
    $region10: #{tpu_custom_call.1} parent=1 // pred_check
      _
    $region11: #{tpu_custom_call.1} parent=1 // pred_check_branch
      %35 = sbr.rel (0) target = $region13
    $region12: #{tpu_custom_call.1} parent=1 // pred_region
      %36 = dma.done [#allocation4], 1024
    $region13: #{tpu_custom_call.1} parent=1 // pred_fallthru
      _
    // Predicated region
    $region14: #{tpu_custom_call.1} parent=1 // pred_check
      _
    $region15: #{tpu_custom_call.1} parent=1 // pred_check_branch
      %38 = sbr.rel (0) target = $region17
    $region16: #{tpu_custom_call.1} parent=1 // pred_region
      %39 = dma.done [#allocation7], 16512
    $region17: #{tpu_custom_call.1} parent=1 // pred_fallthru
      _
    %v40 = vld [vmem:[#allocation6 + $0x400] sm:$0xff]
    %v41 = vld [vmem:[#allocation3] sm:$0xff]
    %v42 = vld [vmem:[#allocation3 + $0x8] sm:$0xff]
    %v43 = vld [vmem:[#allocation3 + $0x10] sm:$0xff]
    %v44 = vld [vmem:[#allocation3 + $0x18] sm:$0xff]
    %v45 = vld [vmem:[#allocation3 + $0x20] sm:$0xff]
    %v46 = vld [vmem:[#allocation3 + $0x28] sm:$0xff]
    %v47 = vld [vmem:[#allocation3 + $0x30] sm:$0xff]
    %v48 = vld [vmem:[#allocation3 + $0x38] sm:$0xff]
    %v49 = vld [vmem:[#allocation6] sm:$0xff]
    %v50 = vld [vmem:[#allocation6 + $0x8] sm:$0xff]
    %v51 = vld [vmem:[#allocation6 + $0x10] sm:$0xff]
    %v52 = vld [vmem:[#allocation6 + $0x18] sm:$0xff]
    %v53 = vld [vmem:[#allocation6 + $0x20] sm:$0xff]
    %v54 = vld [vmem:[#allocation6 + $0x28] sm:$0xff]
    %v55 = vld [vmem:[#allocation6 + $0x30] sm:$0xff]
    %v56 = vld [vmem:[#allocation6 + $0x38] sm:$0xff]
    %v57 = vld [vmem:[#allocation6 + $0x40] sm:$0xff]
    %v58 = vld [vmem:[#allocation6 + $0x48] sm:$0xff]
    %v59 = vld [vmem:[#allocation6 + $0x50] sm:$0xff]
    %v60 = vld [vmem:[#allocation6 + $0x58] sm:$0xff]
    %v61 = vld [vmem:[#allocation6 + $0x60] sm:$0xff]
    %v62 = vld [vmem:[#allocation6 + $0x68] sm:$0xff]
    %v63 = vld [vmem:[#allocation6 + $0x70] sm:$0xff]
    %v64 = vld [vmem:[#allocation6 + $0x78] sm:$0xff]
    %v65 = vlaneseq
    %v66 = vshrl.u32 %v65, 7
    %v67 = vsub.s32 0, %v66
    %v68 = vrot.slane %v40, %v67
    %69 = vmatprep.subr.mxu0 0.0
    %70 = vmatpush1.msra.mxu0 %v49
    %71 = vmatprep.subr.mxu0 0.0
    %72 = vmatpush1.msra.mxu0 %v50
    %73 = vmatprep.subr.mxu0 0.0
    %74 = vmatpush1.msra.mxu0 %v51
    %75 = vmatprep.subr.mxu0 0.0
    %76 = vmatpush1.msra.mxu0 %v52
    %77 = vmatprep.subr.mxu0 0.0
    %78 = vmatpush1.msra.mxu0 %v53
    %79 = vmatprep.subr.mxu0 0.0
    %80 = vmatpush1.msra.mxu0 %v54
    %81 = vmatprep.subr.mxu0 0.0
    %82 = vmatpush1.msra.mxu0 %v55
    %83 = vmatprep.subr.mxu0 0.0
    %84 = vmatpush1.msra.mxu0 %v56
    %85 = vmatprep.subr.mxu0 0.0
    %86 = vmatpush1.msra.mxu0 %v57
    %87 = vmatprep.subr.mxu0 0.0
    %88 = vmatpush1.msra.mxu0 %v58
    %89 = vmatprep.subr.mxu0 0.0
    %90 = vmatpush1.msra.mxu0 %v59
    %91 = vmatprep.subr.mxu0 0.0
    %92 = vmatpush1.msra.mxu0 %v60
    %93 = vmatprep.subr.mxu0 0.0
    %94 = vmatpush1.msra.mxu0 %v61
    %95 = vmatprep.subr.mxu0 0.0
    %96 = vmatpush1.msra.mxu0 %v62
    %97 = vmatprep.subr.mxu0 0.0
    %98 = vmatpush1.msra.mxu0 %v63
    %99 = vmatprep.subr.mxu0 0.0
    %100 = vmatpush1.msra.mxu0 %v64
    %101 = vmatprep.subr.mxu0 0.0
    %102 = vmatpush1.msra.mxu0 0.0
    %103 = vmatprep.subr.mxu0 0.0
    %104 = vmatpush1.msra.mxu0 0.0
    %105 = vmatprep.subr.mxu0 0.0
    %106 = vmatpush1.msra.mxu0 0.0
    %107 = vmatprep.subr.mxu0 0.0
    %108 = vmatpush1.msra.mxu0 0.0
    %109 = vmatprep.subr.mxu0 0.0
    %110 = vmatpush1.msra.mxu0 0.0
    %111 = vmatprep.subr.mxu0 0.0
    %112 = vmatpush1.msra.mxu0 0.0
    %113 = vmatprep.subr.mxu0 0.0
    %114 = vmatpush1.msra.mxu0 0.0
    %115 = vmatprep.subr.mxu0 0.0
    %116 = vmatpush1.msra.mxu0 0.0
    %117 = vmatprep.subr.mxu0 0.0
    %118 = vmatpush1.msra.mxu0 0.0
    %119 = vmatprep.subr.mxu0 0.0
    %120 = vmatpush1.msra.mxu0 0.0
    %121 = vmatprep.subr.mxu0 0.0
    %122 = vmatpush1.msra.mxu0 0.0
    %123 = vmatprep.subr.mxu0 0.0
    %124 = vmatpush1.msra.mxu0 0.0
    %125 = vmatprep.subr.mxu0 0.0
    %126 = vmatpush1.msra.mxu0 0.0
    %127 = vmatprep.subr.mxu0 0.0
    %128 = vmatpush1.msra.mxu0 0.0
    %129 = vmatprep.subr.mxu0 0.0
    %130 = vmatpush1.msra.mxu0 0.0
    %131 = vmatprep.subr.mxu0 0.0
    %132 = vmatpush1.msra.mxu0 0.0
    %133 = vmatprep.mubr.f32.mxu0 0.0
    %134 = vmatmul.mubr.f32.gmra.mrb[0].mxu0 %v41
    %v135 = vpop.f32.mrb[0].mxu0
    %v136 = vadd.f32 %v68, %v135
    %v137 = vpop.f32.mrb[0].mxu0
    %138 = vmatprep.mubr.f32.mxu0 0.0
    %139 = vmatmul.mubr.f32.gmra.mrb[0].mxu0 %v42
    %v140 = vpop.f32.mrb[0].mxu0
    %v141 = vadd.f32 %v68, %v140
    %v142 = vpop.f32.mrb[0].mxu0
    %143 = vmatprep.mubr.f32.mxu0 0.0
    %144 = vmatmul.mubr.f32.gmra.mrb[0].mxu0 %v43
    %v145 = vpop.f32.mrb[0].mxu0
    %v146 = vadd.f32 %v68, %v145
    %v147 = vpop.f32.mrb[0].mxu0
    %148 = vmatprep.mubr.f32.mxu0 0.0
    %149 = vmatmul.mubr.f32.gmra.mrb[0].mxu0 %v44
    %v150 = vpop.f32.mrb[0].mxu0
    %v151 = vadd.f32 %v68, %v150
    %v152 = vpop.f32.mrb[0].mxu0
    %153 = vmatprep.mubr.f32.mxu0 0.0
    %154 = vmatmul.mubr.f32.gmra.mrb[0].mxu0 %v45
    %v155 = vpop.f32.mrb[0].mxu0
    %v156 = vadd.f32 %v68, %v155
    %v157 = vpop.f32.mrb[0].mxu0
    %158 = vmatprep.mubr.f32.mxu0 0.0
    %159 = vmatmul.mubr.f32.gmra.mrb[0].mxu0 %v46
    %v160 = vpop.f32.mrb[0].mxu0
    %v161 = vadd.f32 %v68, %v160
    %v162 = vpop.f32.mrb[0].mxu0
    %163 = vmatprep.mubr.f32.mxu0 0.0
    %164 = vmatmul.mubr.f32.gmra.mrb[0].mxu0 %v47
    %v165 = vpop.f32.mrb[0].mxu0
    %v166 = vadd.f32 %v68, %v165
    %v167 = vpop.f32.mrb[0].mxu0
    %168 = vmatprep.mubr.f32.mxu0 0.0
    %169 = vmatmul.mubr.f32.gmra.mrb[0].mxu0 %v48
    %v170 = vpop.f32.mrb[0].mxu0
    %v171 = vadd.f32 %v68, %v170
    %v172 = vpop.f32.mrb[0].mxu0
    %173 = vdwg.mxu0
    %v174 = vtanh.pop %v136
    %v175 = vtanh.pop %v141
    %v176 = vtanh.pop %v146
    %v177 = vtanh.pop %v151
    %v178 = vtanh.pop %v156
    %v179 = vtanh.pop %v161
    %v180 = vtanh.pop %v166
    %v181 = vtanh.pop %v171
    %v182 = vld [vmem:[#allocation6 + $0x80] sm:$0xff]
    %v183 = vld [vmem:[#allocation6 + $0x88] sm:$0xff]
    %v184 = vld [vmem:[#allocation6 + $0x90] sm:$0xff]
    %v185 = vld [vmem:[#allocation6 + $0x98] sm:$0xff]
    %v186 = vld [vmem:[#allocation6 + $0xa0] sm:$0xff]
    %v187 = vld [vmem:[#allocation6 + $0xa8] sm:$0xff]
    %v188 = vld [vmem:[#allocation6 + $0xb0] sm:$0xff]
    %v189 = vld [vmem:[#allocation6 + $0xb8] sm:$0xff]
    %v190 = vld [vmem:[#allocation6 + $0xc0] sm:$0xff]
    %v191 = vld [vmem:[#allocation6 + $0xc8] sm:$0xff]
    %v192 = vld [vmem:[#allocation6 + $0xd0] sm:$0xff]
    %v193 = vld [vmem:[#allocation6 + $0xd8] sm:$0xff]
    %v194 = vld [vmem:[#allocation6 + $0xe0] sm:$0xff]
    %v195 = vld [vmem:[#allocation6 + $0xe8] sm:$0xff]
    %v196 = vld [vmem:[#allocation6 + $0xf0] sm:$0xff]
    %v197 = vld [vmem:[#allocation6 + $0xf8] sm:$0xff]
    %v198 = vlaneseq
    %v199 = vshrl.u32 %v198, 7
    %v200 = vsub.s32 1, %v199
    %v201 = vrot.slane %v40, %v200
    %202 = vmatprep.subr.mxu0 0.0
    %203 = vmatpush1.msra.mxu0 %v182
    %204 = vmatprep.subr.mxu0 0.0
    %205 = vmatpush1.msra.mxu0 %v183
    %206 = vmatprep.subr.mxu0 0.0
    %207 = vmatpush1.msra.mxu0 %v184
    %208 = vmatprep.subr.mxu0 0.0
    %209 = vmatpush1.msra.mxu0 %v185
    %210 = vmatprep.subr.mxu0 0.0
    %211 = vmatpush1.msra.mxu0 %v186
    %212 = vmatprep.subr.mxu0 0.0
    %213 = vmatpush1.msra.mxu0 %v187
    %214 = vmatprep.subr.mxu0 0.0
    %215 = vmatpush1.msra.mxu0 %v188
    %216 = vmatprep.subr.mxu0 0.0
    %217 = vmatpush1.msra.mxu0 %v189
    %218 = vmatprep.subr.mxu0 0.0
    %219 = vmatpush1.msra.mxu0 %v190
    %220 = vmatprep.subr.mxu0 0.0
    %221 = vmatpush1.msra.mxu0 %v191
    %222 = vmatprep.subr.mxu0 0.0
    %223 = vmatpush1.msra.mxu0 %v192
    %224 = vmatprep.subr.mxu0 0.0
    %225 = vmatpush1.msra.mxu0 %v193
    %226 = vmatprep.subr.mxu0 0.0
    %227 = vmatpush1.msra.mxu0 %v194
    %228 = vmatprep.subr.mxu0 0.0
    %229 = vmatpush1.msra.mxu0 %v195
    %230 = vmatprep.subr.mxu0 0.0
    %231 = vmatpush1.msra.mxu0 %v196
    %232 = vmatprep.subr.mxu0 0.0
    %233 = vmatpush1.msra.mxu0 %v197
    %234 = vmatprep.subr.mxu0 0.0
    %235 = vmatpush1.msra.mxu0 0.0
    %236 = vmatprep.subr.mxu0 0.0
    %237 = vmatpush1.msra.mxu0 0.0
    %238 = vmatprep.subr.mxu0 0.0
    %239 = vmatpush1.msra.mxu0 0.0
    %240 = vmatprep.subr.mxu0 0.0
    %241 = vmatpush1.msra.mxu0 0.0
    %242 = vmatprep.subr.mxu0 0.0
    %243 = vmatpush1.msra.mxu0 0.0
    %244 = vmatprep.subr.mxu0 0.0
    %245 = vmatpush1.msra.mxu0 0.0
    %246 = vmatprep.subr.mxu0 0.0
    %247 = vmatpush1.msra.mxu0 0.0
    %248 = vmatprep.subr.mxu0 0.0
    %249 = vmatpush1.msra.mxu0 0.0
    %250 = vmatprep.subr.mxu0 0.0
    %251 = vmatpush1.msra.mxu0 0.0
    %252 = vmatprep.subr.mxu0 0.0
    %253 = vmatpush1.msra.mxu0 0.0
    %254 = vmatprep.subr.mxu0 0.0
    %255 = vmatpush1.msra.mxu0 0.0
    %256 = vmatprep.subr.mxu0 0.0
    %257 = vmatpush1.msra.mxu0 0.0
    %258 = vmatprep.subr.mxu0 0.0
    %259 = vmatpush1.msra.mxu0 0.0
    %260 = vmatprep.subr.mxu0 0.0
    %261 = vmatpush1.msra.mxu0 0.0
    %262 = vmatprep.subr.mxu0 0.0
    %263 = vmatpush1.msra.mxu0 0.0
    %264 = vmatprep.subr.mxu0 0.0
    %265 = vmatpush1.msra.mxu0 0.0
    %266 = vmatprep.mubr.f32.mxu0 0.0
    %267 = vmatmul.mubr.f32.gmra.mrb[0].mxu0 %v174
    %v268 = vpop.f32.mrb[0].mxu0
    %v269 = vadd.f32 %v201, %v268
    %v270 = vpop.f32.mrb[0].mxu0
    %271 = vmatprep.mubr.f32.mxu0 0.0
    %272 = vmatmul.mubr.f32.gmra.mrb[0].mxu0 %v175
    %v273 = vpop.f32.mrb[0].mxu0
    %v274 = vadd.f32 %v201, %v273
    %v275 = vpop.f32.mrb[0].mxu0
    %276 = vmatprep.mubr.f32.mxu0 0.0
    %277 = vmatmul.mubr.f32.gmra.mrb[0].mxu0 %v176
    %v278 = vpop.f32.mrb[0].mxu0
    %v279 = vadd.f32 %v201, %v278
    %v280 = vpop.f32.mrb[0].mxu0
    %281 = vmatprep.mubr.f32.mxu0 0.0
    %282 = vmatmul.mubr.f32.gmra.mrb[0].mxu0 %v177
    %v283 = vpop.f32.mrb[0].mxu0
    %v284 = vadd.f32 %v201, %v283
    %v285 = vpop.f32.mrb[0].mxu0
    %286 = vmatprep.mubr.f32.mxu0 0.0
    %287 = vmatmul.mubr.f32.gmra.mrb[0].mxu0 %v178
    %v288 = vpop.f32.mrb[0].mxu0
    %v289 = vadd.f32 %v201, %v288
    %v290 = vpop.f32.mrb[0].mxu0
    %291 = vmatprep.mubr.f32.mxu0 0.0
    %292 = vmatmul.mubr.f32.gmra.mrb[0].mxu0 %v179
    %v293 = vpop.f32.mrb[0].mxu0
    %v294 = vadd.f32 %v201, %v293
    %v295 = vpop.f32.mrb[0].mxu0
    %296 = vmatprep.mubr.f32.mxu0 0.0
    %297 = vmatmul.mubr.f32.gmra.mrb[0].mxu0 %v180
    %v298 = vpop.f32.mrb[0].mxu0
    %v299 = vadd.f32 %v201, %v298
    %v300 = vpop.f32.mrb[0].mxu0
    %301 = vmatprep.mubr.f32.mxu0 0.0
    %302 = vmatmul.mubr.f32.gmra.mrb[0].mxu0 %v181
    %v303 = vpop.f32.mrb[0].mxu0
    %v304 = vadd.f32 %v201, %v303
    %v305 = vpop.f32.mrb[0].mxu0
    %306 = vdwg.mxu0
    %v307 = vtanh.pop %v269
    %v308 = vtanh.pop %v274
    %v309 = vtanh.pop %v279
    %v310 = vtanh.pop %v284
    %v311 = vtanh.pop %v289
    %v312 = vtanh.pop %v294
    %v313 = vtanh.pop %v299
    %v314 = vtanh.pop %v304
    %v315 = vld [vmem:[#allocation6 + $0x100] sm:$0xff]
    %v316 = vld [vmem:[#allocation6 + $0x108] sm:$0xff]
    %v317 = vld [vmem:[#allocation6 + $0x110] sm:$0xff]
    %v318 = vld [vmem:[#allocation6 + $0x118] sm:$0xff]
    %v319 = vld [vmem:[#allocation6 + $0x120] sm:$0xff]
    %v320 = vld [vmem:[#allocation6 + $0x128] sm:$0xff]
    %v321 = vld [vmem:[#allocation6 + $0x130] sm:$0xff]
    %v322 = vld [vmem:[#allocation6 + $0x138] sm:$0xff]
    %v323 = vld [vmem:[#allocation6 + $0x140] sm:$0xff]
    %v324 = vld [vmem:[#allocation6 + $0x148] sm:$0xff]
    %v325 = vld [vmem:[#allocation6 + $0x150] sm:$0xff]
    %v326 = vld [vmem:[#allocation6 + $0x158] sm:$0xff]
    %v327 = vld [vmem:[#allocation6 + $0x160] sm:$0xff]
    %v328 = vld [vmem:[#allocation6 + $0x168] sm:$0xff]
    %v329 = vld [vmem:[#allocation6 + $0x170] sm:$0xff]
    %v330 = vld [vmem:[#allocation6 + $0x178] sm:$0xff]
    %v331 = vlaneseq
    %v332 = vshrl.u32 %v331, 7
    %v333 = vsub.s32 2, %v332
    %v334 = vrot.slane %v40, %v333
    %335 = vmatprep.subr.mxu0 0.0
    %336 = vmatpush1.msra.mxu0 %v315
    %337 = vmatprep.subr.mxu0 0.0
    %338 = vmatpush1.msra.mxu0 %v316
    %339 = vmatprep.subr.mxu0 0.0
    %340 = vmatpush1.msra.mxu0 %v317
    %341 = vmatprep.subr.mxu0 0.0
    %342 = vmatpush1.msra.mxu0 %v318
    %343 = vmatprep.subr.mxu0 0.0
    %344 = vmatpush1.msra.mxu0 %v319
    %345 = vmatprep.subr.mxu0 0.0
    %346 = vmatpush1.msra.mxu0 %v320
    %347 = vmatprep.subr.mxu0 0.0
    %348 = vmatpush1.msra.mxu0 %v321
    %349 = vmatprep.subr.mxu0 0.0
    %350 = vmatpush1.msra.mxu0 %v322
    %351 = vmatprep.subr.mxu0 0.0
    %352 = vmatpush1.msra.mxu0 %v323
    %353 = vmatprep.subr.mxu0 0.0
    %354 = vmatpush1.msra.mxu0 %v324
    %355 = vmatprep.subr.mxu0 0.0
    %356 = vmatpush1.msra.mxu0 %v325
    %357 = vmatprep.subr.mxu0 0.0
    %358 = vmatpush1.msra.mxu0 %v326
    %359 = vmatprep.subr.mxu0 0.0
    %360 = vmatpush1.msra.mxu0 %v327
    %361 = vmatprep.subr.mxu0 0.0
    %362 = vmatpush1.msra.mxu0 %v328
    %363 = vmatprep.subr.mxu0 0.0
    %364 = vmatpush1.msra.mxu0 %v329
    %365 = vmatprep.subr.mxu0 0.0
    %366 = vmatpush1.msra.mxu0 %v330
    %367 = vmatprep.subr.mxu0 0.0
    %368 = vmatpush1.msra.mxu0 0.0
    %369 = vmatprep.subr.mxu0 0.0
    %370 = vmatpush1.msra.mxu0 0.0
    %371 = vmatprep.subr.mxu0 0.0
    %372 = vmatpush1.msra.mxu0 0.0
    %373 = vmatprep.subr.mxu0 0.0
    %374 = vmatpush1.msra.mxu0 0.0
    %375 = vmatprep.subr.mxu0 0.0
    %376 = vmatpush1.msra.mxu0 0.0
    %377 = vmatprep.subr.mxu0 0.0
    %378 = vmatpush1.msra.mxu0 0.0
    %379 = vmatprep.subr.mxu0 0.0
    %380 = vmatpush1.msra.mxu0 0.0
    %381 = vmatprep.subr.mxu0 0.0
    %382 = vmatpush1.msra.mxu0 0.0
    %383 = vmatprep.subr.mxu0 0.0
    %384 = vmatpush1.msra.mxu0 0.0
    %385 = vmatprep.subr.mxu0 0.0
    %386 = vmatpush1.msra.mxu0 0.0
    %387 = vmatprep.subr.mxu0 0.0
    %388 = vmatpush1.msra.mxu0 0.0
    %389 = vmatprep.subr.mxu0 0.0
    %390 = vmatpush1.msra.mxu0 0.0
    %391 = vmatprep.subr.mxu0 0.0
    %392 = vmatpush1.msra.mxu0 0.0
    %393 = vmatprep.subr.mxu0 0.0
    %394 = vmatpush1.msra.mxu0 0.0
    %395 = vmatprep.subr.mxu0 0.0
    %396 = vmatpush1.msra.mxu0 0.0
    %397 = vmatprep.subr.mxu0 0.0
    %398 = vmatpush1.msra.mxu0 0.0
    %399 = vmatprep.mubr.f32.mxu0 0.0
    %400 = vmatmul.mubr.f32.gmra.mrb[0].mxu0 %v307
    %v401 = vpop.f32.mrb[0].mxu0
    %v402 = vadd.f32 %v334, %v401
    %v403 = vpop.f32.mrb[0].mxu0
    %404 = vmatprep.mubr.f32.mxu0 0.0
    %405 = vmatmul.mubr.f32.gmra.mrb[0].mxu0 %v308
    %v406 = vpop.f32.mrb[0].mxu0
    %v407 = vadd.f32 %v334, %v406
    %v408 = vpop.f32.mrb[0].mxu0
    %409 = vmatprep.mubr.f32.mxu0 0.0
    %410 = vmatmul.mubr.f32.gmra.mrb[0].mxu0 %v309
    %v411 = vpop.f32.mrb[0].mxu0
    %v412 = vadd.f32 %v334, %v411
    %v413 = vpop.f32.mrb[0].mxu0
    %414 = vmatprep.mubr.f32.mxu0 0.0
    %415 = vmatmul.mubr.f32.gmra.mrb[0].mxu0 %v310
    %v416 = vpop.f32.mrb[0].mxu0
    %v417 = vadd.f32 %v334, %v416
    %v418 = vpop.f32.mrb[0].mxu0
    %419 = vmatprep.mubr.f32.mxu0 0.0
    %420 = vmatmul.mubr.f32.gmra.mrb[0].mxu0 %v311
    %v421 = vpop.f32.mrb[0].mxu0
    %v422 = vadd.f32 %v334, %v421
    %v423 = vpop.f32.mrb[0].mxu0
    %424 = vmatprep.mubr.f32.mxu0 0.0
    %425 = vmatmul.mubr.f32.gmra.mrb[0].mxu0 %v312
    %v426 = vpop.f32.mrb[0].mxu0
    %v427 = vadd.f32 %v334, %v426
    %v428 = vpop.f32.mrb[0].mxu0
    %429 = vmatprep.mubr.f32.mxu0 0.0
    %430 = vmatmul.mubr.f32.gmra.mrb[0].mxu0 %v313
    %v431 = vpop.f32.mrb[0].mxu0
    %v432 = vadd.f32 %v334, %v431
    %v433 = vpop.f32.mrb[0].mxu0
    %434 = vmatprep.mubr.f32.mxu0 0.0
    %435 = vmatmul.mubr.f32.gmra.mrb[0].mxu0 %v314
    %v436 = vpop.f32.mrb[0].mxu0
    %v437 = vadd.f32 %v334, %v436
    %v438 = vpop.f32.mrb[0].mxu0
    %439 = vdwg.mxu0
    %v440 = vld [vmem:[#allocation6 + $0x180] sm:$0xff]
    %v441 = vld [vmem:[#allocation6 + $0x188] sm:$0xff]
    %v442 = vld [vmem:[#allocation6 + $0x190] sm:$0xff]
    %v443 = vld [vmem:[#allocation6 + $0x198] sm:$0xff]
    %v444 = vld [vmem:[#allocation6 + $0x1a0] sm:$0xff]
    %v445 = vld [vmem:[#allocation6 + $0x1a8] sm:$0xff]
    %v446 = vld [vmem:[#allocation6 + $0x1b0] sm:$0xff]
    %v447 = vld [vmem:[#allocation6 + $0x1b8] sm:$0xff]
    %v448 = vld [vmem:[#allocation6 + $0x1c0] sm:$0xff]
    %v449 = vld [vmem:[#allocation6 + $0x1c8] sm:$0xff]
    %v450 = vld [vmem:[#allocation6 + $0x1d0] sm:$0xff]
    %v451 = vld [vmem:[#allocation6 + $0x1d8] sm:$0xff]
    %v452 = vld [vmem:[#allocation6 + $0x1e0] sm:$0xff]
    %v453 = vld [vmem:[#allocation6 + $0x1e8] sm:$0xff]
    %v454 = vld [vmem:[#allocation6 + $0x1f0] sm:$0xff]
    %v455 = vld [vmem:[#allocation6 + $0x1f8] sm:$0xff]
    %v456 = vlaneseq
    %v457 = vshrl.u32 %v456, 7
    %v458 = vsub.s32 3, %v457
    %v459 = vrot.slane %v40, %v458
    %460 = vmatprep.subr.mxu0 0.0
    %461 = vmatpush1.msra.mxu0 %v440
    %462 = vmatprep.subr.mxu0 0.0
    %463 = vmatpush1.msra.mxu0 %v441
    %464 = vmatprep.subr.mxu0 0.0
    %465 = vmatpush1.msra.mxu0 %v442
    %466 = vmatprep.subr.mxu0 0.0
    %467 = vmatpush1.msra.mxu0 %v443
    %468 = vmatprep.subr.mxu0 0.0
    %469 = vmatpush1.msra.mxu0 %v444
    %470 = vmatprep.subr.mxu0 0.0
    %471 = vmatpush1.msra.mxu0 %v445
    %472 = vmatprep.subr.mxu0 0.0
    %473 = vmatpush1.msra.mxu0 %v446
    %474 = vmatprep.subr.mxu0 0.0
    %475 = vmatpush1.msra.mxu0 %v447
    %476 = vmatprep.subr.mxu0 0.0
    %477 = vmatpush1.msra.mxu0 %v448
    %478 = vmatprep.subr.mxu0 0.0
    %479 = vmatpush1.msra.mxu0 %v449
    %480 = vmatprep.subr.mxu0 0.0
    %481 = vmatpush1.msra.mxu0 %v450
    %482 = vmatprep.subr.mxu0 0.0
    %483 = vmatpush1.msra.mxu0 %v451
    %484 = vmatprep.subr.mxu0 0.0
    %485 = vmatpush1.msra.mxu0 %v452
    %486 = vmatprep.subr.mxu0 0.0
    %487 = vmatpush1.msra.mxu0 %v453
    %488 = vmatprep.subr.mxu0 0.0
    %489 = vmatpush1.msra.mxu0 %v454
    %490 = vmatprep.subr.mxu0 0.0
    %491 = vmatpush1.msra.mxu0 %v455
    %492 = vmatprep.subr.mxu0 0.0
    %493 = vmatpush1.msra.mxu0 0.0
    %494 = vmatprep.subr.mxu0 0.0
    %495 = vmatpush1.msra.mxu0 0.0
    %496 = vmatprep.subr.mxu0 0.0
    %497 = vmatpush1.msra.mxu0 0.0
    %498 = vmatprep.subr.mxu0 0.0
    %499 = vmatpush1.msra.mxu0 0.0
    %500 = vmatprep.subr.mxu0 0.0
    %501 = vmatpush1.msra.mxu0 0.0
    %502 = vmatprep.subr.mxu0 0.0
    %503 = vmatpush1.msra.mxu0 0.0
    %504 = vmatprep.subr.mxu0 0.0
    %505 = vmatpush1.msra.mxu0 0.0
    %506 = vmatprep.subr.mxu0 0.0
    %507 = vmatpush1.msra.mxu0 0.0
    %508 = vmatprep.subr.mxu0 0.0
    %509 = vmatpush1.msra.mxu0 0.0
    %510 = vmatprep.subr.mxu0 0.0
    %511 = vmatpush1.msra.mxu0 0.0
    %512 = vmatprep.subr.mxu0 0.0
    %513 = vmatpush1.msra.mxu0 0.0
    %514 = vmatprep.subr.mxu0 0.0
    %515 = vmatpush1.msra.mxu0 0.0
    %516 = vmatprep.subr.mxu0 0.0
    %517 = vmatpush1.msra.mxu0 0.0
    %518 = vmatprep.subr.mxu0 0.0
    %519 = vmatpush1.msra.mxu0 0.0
    %520 = vmatprep.subr.mxu0 0.0
    %521 = vmatpush1.msra.mxu0 0.0
    %522 = vmatprep.subr.mxu0 0.0
    %523 = vmatpush1.msra.mxu0 0.0
    %524 = vmatprep.mubr.f32.mxu0 0.0
    %525 = vmatmul.mubr.f32.gmra.mrb[0].mxu0 %v402
    %v526 = vpop.f32.mrb[0].mxu0
    %v527 = vadd.f32 %v459, %v526
    %v528 = vpop.f32.mrb[0].mxu0
    %529 = vmatprep.mubr.f32.mxu0 0.0
    %530 = vmatmul.mubr.f32.gmra.mrb[0].mxu0 %v407
    %v531 = vpop.f32.mrb[0].mxu0
    %v532 = vadd.f32 %v459, %v531
    %v533 = vpop.f32.mrb[0].mxu0
    %534 = vmatprep.mubr.f32.mxu0 0.0
    %535 = vmatmul.mubr.f32.gmra.mrb[0].mxu0 %v412
    %v536 = vpop.f32.mrb[0].mxu0
    %v537 = vadd.f32 %v459, %v536
    %v538 = vpop.f32.mrb[0].mxu0
    %539 = vmatprep.mubr.f32.mxu0 0.0
    %540 = vmatmul.mubr.f32.gmra.mrb[0].mxu0 %v417
    %v541 = vpop.f32.mrb[0].mxu0
    %v542 = vadd.f32 %v459, %v541
    %v543 = vpop.f32.mrb[0].mxu0
    %544 = vmatprep.mubr.f32.mxu0 0.0
    %545 = vmatmul.mubr.f32.gmra.mrb[0].mxu0 %v422
    %v546 = vpop.f32.mrb[0].mxu0
    %v547 = vadd.f32 %v459, %v546
    %v548 = vpop.f32.mrb[0].mxu0
    %549 = vmatprep.mubr.f32.mxu0 0.0
    %550 = vmatmul.mubr.f32.gmra.mrb[0].mxu0 %v427
    %v551 = vpop.f32.mrb[0].mxu0
    %v552 = vadd.f32 %v459, %v551
    %v553 = vpop.f32.mrb[0].mxu0
    %554 = vmatprep.mubr.f32.mxu0 0.0
    %555 = vmatmul.mubr.f32.gmra.mrb[0].mxu0 %v432
    %v556 = vpop.f32.mrb[0].mxu0
    %v557 = vadd.f32 %v459, %v556
    %v558 = vpop.f32.mrb[0].mxu0
    %559 = vmatprep.mubr.f32.mxu0 0.0
    %560 = vmatmul.mubr.f32.gmra.mrb[0].mxu0 %v437
    %v561 = vpop.f32.mrb[0].mxu0
    %v562 = vadd.f32 %v459, %v561
    %v563 = vpop.f32.mrb[0].mxu0
    %564 = vdwg.mxu0
    %v565 = vld [vmem:[#allocation6 + $0x200] sm:$0xff]
    %v566 = vld [vmem:[#allocation6 + $0x208] sm:$0xff]
    %v567 = vld [vmem:[#allocation6 + $0x210] sm:$0xff]
    %v568 = vld [vmem:[#allocation6 + $0x218] sm:$0xff]
    %v569 = vld [vmem:[#allocation6 + $0x220] sm:$0xff]
    %v570 = vld [vmem:[#allocation6 + $0x228] sm:$0xff]
    %v571 = vld [vmem:[#allocation6 + $0x230] sm:$0xff]
    %v572 = vld [vmem:[#allocation6 + $0x238] sm:$0xff]
    %v573 = vld [vmem:[#allocation6 + $0x240] sm:$0xff]
    %v574 = vld [vmem:[#allocation6 + $0x248] sm:$0xff]
    %v575 = vld [vmem:[#allocation6 + $0x250] sm:$0xff]
    %v576 = vld [vmem:[#allocation6 + $0x258] sm:$0xff]
    %v577 = vld [vmem:[#allocation6 + $0x260] sm:$0xff]
    %v578 = vld [vmem:[#allocation6 + $0x268] sm:$0xff]
    %v579 = vld [vmem:[#allocation6 + $0x270] sm:$0xff]
    %v580 = vld [vmem:[#allocation6 + $0x278] sm:$0xff]
    %581 = vmatprep.subr.mxu0 0.0
    %582 = vmatpush1.msra.mxu0 %v565
    %583 = vmatprep.subr.mxu0 0.0
    %584 = vmatpush1.msra.mxu0 %v566
    %585 = vmatprep.subr.mxu0 0.0
    %586 = vmatpush1.msra.mxu0 %v567
    %587 = vmatprep.subr.mxu0 0.0
    %588 = vmatpush1.msra.mxu0 %v568
    %589 = vmatprep.subr.mxu0 0.0
    %590 = vmatpush1.msra.mxu0 %v569
    %591 = vmatprep.subr.mxu0 0.0
    %592 = vmatpush1.msra.mxu0 %v570
    %593 = vmatprep.subr.mxu0 0.0
    %594 = vmatpush1.msra.mxu0 %v571
    %595 = vmatprep.subr.mxu0 0.0
    %596 = vmatpush1.msra.mxu0 %v572
    %597 = vmatprep.subr.mxu0 0.0
    %598 = vmatpush1.msra.mxu0 %v573
    %599 = vmatprep.subr.mxu0 0.0
    %600 = vmatpush1.msra.mxu0 %v574
    %601 = vmatprep.subr.mxu0 0.0
    %602 = vmatpush1.msra.mxu0 %v575
    %603 = vmatprep.subr.mxu0 0.0
    %604 = vmatpush1.msra.mxu0 %v576
    %605 = vmatprep.subr.mxu0 0.0
    %606 = vmatpush1.msra.mxu0 %v577
    %607 = vmatprep.subr.mxu0 0.0
    %608 = vmatpush1.msra.mxu0 %v578
    %609 = vmatprep.subr.mxu0 0.0
    %610 = vmatpush1.msra.mxu0 %v579
    %611 = vmatprep.subr.mxu0 0.0
    %612 = vmatpush1.msra.mxu0 %v580
    %613 = vmatprep.subr.mxu0 0.0
    %614 = vmatpush1.msra.mxu0 0.0
    %615 = vmatprep.subr.mxu0 0.0
    %616 = vmatpush1.msra.mxu0 0.0
    %617 = vmatprep.subr.mxu0 0.0
    %618 = vmatpush1.msra.mxu0 0.0
    %619 = vmatprep.subr.mxu0 0.0
    %620 = vmatpush1.msra.mxu0 0.0
    %621 = vmatprep.subr.mxu0 0.0
    %622 = vmatpush1.msra.mxu0 0.0
    %623 = vmatprep.subr.mxu0 0.0
    %624 = vmatpush1.msra.mxu0 0.0
    %625 = vmatprep.subr.mxu0 0.0
    %626 = vmatpush1.msra.mxu0 0.0
    %627 = vmatprep.subr.mxu0 0.0
    %628 = vmatpush1.msra.mxu0 0.0
    %629 = vmatprep.subr.mxu0 0.0
    %630 = vmatpush1.msra.mxu0 0.0
    %631 = vmatprep.subr.mxu0 0.0
    %632 = vmatpush1.msra.mxu0 0.0
    %633 = vmatprep.subr.mxu0 0.0
    %634 = vmatpush1.msra.mxu0 0.0
    %635 = vmatprep.subr.mxu0 0.0
    %636 = vmatpush1.msra.mxu0 0.0
    %637 = vmatprep.subr.mxu0 0.0
    %638 = vmatpush1.msra.mxu0 0.0
    %639 = vmatprep.subr.mxu0 0.0
    %640 = vmatpush1.msra.mxu0 0.0
    %641 = vmatprep.subr.mxu0 0.0
    %642 = vmatpush1.msra.mxu0 0.0
    %643 = vmatprep.subr.mxu0 0.0
    %644 = vmatpush1.msra.mxu0 0.0
    %645 = vmatprep.mubr.f32.mxu0 0.0
    %646 = vmatmul.mubr.f32.gmra.mrb[0].mxu0 0.0
    %v647 = vpop.f32.mrb[0].mxu0
    %v648 = vadd.f32 0.0, %v647
    %v649 = vpop.f32.mrb[0].mxu0
    %650 = vdwg.mxu0
    %v651 = vadd.f32 %v527, %v648
    %v652 = vtanh.pop %v651
    %653 = vst [vmem:[#allocation2] sm:$0xff] %v652
    %654 = vmatprep.subr.mxu0 0.0
    %655 = vmatpush1.msra.mxu0 %v565
    %656 = vmatprep.subr.mxu0 0.0
    %657 = vmatpush1.msra.mxu0 %v566
    %658 = vmatprep.subr.mxu0 0.0
    %659 = vmatpush1.msra.mxu0 %v567
    %660 = vmatprep.subr.mxu0 0.0
    %661 = vmatpush1.msra.mxu0 %v568
    %662 = vmatprep.subr.mxu0 0.0
    %663 = vmatpush1.msra.mxu0 %v569
    %664 = vmatprep.subr.mxu0 0.0
    %665 = vmatpush1.msra.mxu0 %v570
    %666 = vmatprep.subr.mxu0 0.0
    %667 = vmatpush1.msra.mxu0 %v571
    %668 = vmatprep.subr.mxu0 0.0
    %669 = vmatpush1.msra.mxu0 %v572
    %670 = vmatprep.subr.mxu0 0.0
    %671 = vmatpush1.msra.mxu0 %v573
    %672 = vmatprep.subr.mxu0 0.0
    %673 = vmatpush1.msra.mxu0 %v574
    %674 = vmatprep.subr.mxu0 0.0
    %675 = vmatpush1.msra.mxu0 %v575
    %676 = vmatprep.subr.mxu0 0.0
    %677 = vmatpush1.msra.mxu0 %v576
    %678 = vmatprep.subr.mxu0 0.0
    %679 = vmatpush1.msra.mxu0 %v577
    %680 = vmatprep.subr.mxu0 0.0
    %681 = vmatpush1.msra.mxu0 %v578
    %682 = vmatprep.subr.mxu0 0.0
    %683 = vmatpush1.msra.mxu0 %v579
    %684 = vmatprep.subr.mxu0 0.0
    %685 = vmatpush1.msra.mxu0 %v580
    %686 = vmatprep.subr.mxu0 0.0
    %687 = vmatpush1.msra.mxu0 0.0
    %688 = vmatprep.subr.mxu0 0.0
    %689 = vmatpush1.msra.mxu0 0.0
    %690 = vmatprep.subr.mxu0 0.0
    %691 = vmatpush1.msra.mxu0 0.0
    %692 = vmatprep.subr.mxu0 0.0
    %693 = vmatpush1.msra.mxu0 0.0
    %694 = vmatprep.subr.mxu0 0.0
    %695 = vmatpush1.msra.mxu0 0.0
    %696 = vmatprep.subr.mxu0 0.0
    %697 = vmatpush1.msra.mxu0 0.0
    %698 = vmatprep.subr.mxu0 0.0
    %699 = vmatpush1.msra.mxu0 0.0
    %700 = vmatprep.subr.mxu0 0.0
    %701 = vmatpush1.msra.mxu0 0.0
    %702 = vmatprep.subr.mxu0 0.0
    %703 = vmatpush1.msra.mxu0 0.0
    %704 = vmatprep.subr.mxu0 0.0
    %705 = vmatpush1.msra.mxu0 0.0
    %706 = vmatprep.subr.mxu0 0.0
    %707 = vmatpush1.msra.mxu0 0.0
    %708 = vmatprep.subr.mxu0 0.0
    %709 = vmatpush1.msra.mxu0 0.0
    %710 = vmatprep.subr.mxu0 0.0
    %711 = vmatpush1.msra.mxu0 0.0
    %712 = vmatprep.subr.mxu0 0.0
    %713 = vmatpush1.msra.mxu0 0.0
    %714 = vmatprep.subr.mxu0 0.0
    %715 = vmatpush1.msra.mxu0 0.0
    %716 = vmatprep.subr.mxu0 0.0
    %717 = vmatpush1.msra.mxu0 0.0
    %718 = vmatprep.mubr.f32.mxu0 0.0
    %719 = vmatmul.mubr.f32.gmra.mrb[0].mxu0 %v652
    %v720 = vpop.f32.mrb[0].mxu0
    %v721 = vadd.f32 0.0, %v720
    %v722 = vpop.f32.mrb[0].mxu0
    %723 = vdwg.mxu0
    %v724 = vadd.f32 %v532, %v721
    %v725 = vtanh.pop %v724
    %726 = vst [vmem:[#allocation2 + $0x8] sm:$0xff] %v725
    %727 = vmatprep.subr.mxu0 0.0
    %728 = vmatpush1.msra.mxu0 %v565
    %729 = vmatprep.subr.mxu0 0.0
    %730 = vmatpush1.msra.mxu0 %v566
    %731 = vmatprep.subr.mxu0 0.0
    %732 = vmatpush1.msra.mxu0 %v567
    %733 = vmatprep.subr.mxu0 0.0
    %734 = vmatpush1.msra.mxu0 %v568
    %735 = vmatprep.subr.mxu0 0.0
    %736 = vmatpush1.msra.mxu0 %v569
    %737 = vmatprep.subr.mxu0 0.0
    %738 = vmatpush1.msra.mxu0 %v570
    %739 = vmatprep.subr.mxu0 0.0
    %740 = vmatpush1.msra.mxu0 %v571
    %741 = vmatprep.subr.mxu0 0.0
    %742 = vmatpush1.msra.mxu0 %v572
    %743 = vmatprep.subr.mxu0 0.0
    %744 = vmatpush1.msra.mxu0 %v573
    %745 = vmatprep.subr.mxu0 0.0
    %746 = vmatpush1.msra.mxu0 %v574
    %747 = vmatprep.subr.mxu0 0.0
    %748 = vmatpush1.msra.mxu0 %v575
    %749 = vmatprep.subr.mxu0 0.0
    %750 = vmatpush1.msra.mxu0 %v576
    %751 = vmatprep.subr.mxu0 0.0
    %752 = vmatpush1.msra.mxu0 %v577
    %753 = vmatprep.subr.mxu0 0.0
    %754 = vmatpush1.msra.mxu0 %v578
    %755 = vmatprep.subr.mxu0 0.0
    %756 = vmatpush1.msra.mxu0 %v579
    %757 = vmatprep.subr.mxu0 0.0
    %758 = vmatpush1.msra.mxu0 %v580
    %759 = vmatprep.subr.mxu0 0.0
    %760 = vmatpush1.msra.mxu0 0.0
    %761 = vmatprep.subr.mxu0 0.0
    %762 = vmatpush1.msra.mxu0 0.0
    %763 = vmatprep.subr.mxu0 0.0
    %764 = vmatpush1.msra.mxu0 0.0
    %765 = vmatprep.subr.mxu0 0.0
    %766 = vmatpush1.msra.mxu0 0.0
    %767 = vmatprep.subr.mxu0 0.0
    %768 = vmatpush1.msra.mxu0 0.0
    %769 = vmatprep.subr.mxu0 0.0
    %770 = vmatpush1.msra.mxu0 0.0
    %771 = vmatprep.subr.mxu0 0.0
    %772 = vmatpush1.msra.mxu0 0.0
    %773 = vmatprep.subr.mxu0 0.0
    %774 = vmatpush1.msra.mxu0 0.0
    %775 = vmatprep.subr.mxu0 0.0
    %776 = vmatpush1.msra.mxu0 0.0
    %777 = vmatprep.subr.mxu0 0.0
    %778 = vmatpush1.msra.mxu0 0.0
    %779 = vmatprep.subr.mxu0 0.0
    %780 = vmatpush1.msra.mxu0 0.0
    %781 = vmatprep.subr.mxu0 0.0
    %782 = vmatpush1.msra.mxu0 0.0
    %783 = vmatprep.subr.mxu0 0.0
    %784 = vmatpush1.msra.mxu0 0.0
    %785 = vmatprep.subr.mxu0 0.0
    %786 = vmatpush1.msra.mxu0 0.0
    %787 = vmatprep.subr.mxu0 0.0
    %788 = vmatpush1.msra.mxu0 0.0
    %789 = vmatprep.subr.mxu0 0.0
    %790 = vmatpush1.msra.mxu0 0.0
    %791 = vmatprep.mubr.f32.mxu0 0.0
    %792 = vmatmul.mubr.f32.gmra.mrb[0].mxu0 %v725
    %v793 = vpop.f32.mrb[0].mxu0
    %v794 = vadd.f32 0.0, %v793
    %v795 = vpop.f32.mrb[0].mxu0
    %796 = vdwg.mxu0
    %v797 = vadd.f32 %v537, %v794
    %v798 = vtanh.pop %v797
    %799 = vst [vmem:[#allocation2 + $0x10] sm:$0xff] %v798
    %800 = vmatprep.subr.mxu0 0.0
    %801 = vmatpush1.msra.mxu0 %v565
    %802 = vmatprep.subr.mxu0 0.0
    %803 = vmatpush1.msra.mxu0 %v566
    %804 = vmatprep.subr.mxu0 0.0
    %805 = vmatpush1.msra.mxu0 %v567
    %806 = vmatprep.subr.mxu0 0.0
    %807 = vmatpush1.msra.mxu0 %v568
    %808 = vmatprep.subr.mxu0 0.0
    %809 = vmatpush1.msra.mxu0 %v569
    %810 = vmatprep.subr.mxu0 0.0
    %811 = vmatpush1.msra.mxu0 %v570
    %812 = vmatprep.subr.mxu0 0.0
    %813 = vmatpush1.msra.mxu0 %v571
    %814 = vmatprep.subr.mxu0 0.0
    %815 = vmatpush1.msra.mxu0 %v572
    %816 = vmatprep.subr.mxu0 0.0
    %817 = vmatpush1.msra.mxu0 %v573
    %818 = vmatprep.subr.mxu0 0.0
    %819 = vmatpush1.msra.mxu0 %v574
    %820 = vmatprep.subr.mxu0 0.0
    %821 = vmatpush1.msra.mxu0 %v575
    %822 = vmatprep.subr.mxu0 0.0
    %823 = vmatpush1.msra.mxu0 %v576
    %824 = vmatprep.subr.mxu0 0.0
    %825 = vmatpush1.msra.mxu0 %v577
    %826 = vmatprep.subr.mxu0 0.0
    %827 = vmatpush1.msra.mxu0 %v578
    %828 = vmatprep.subr.mxu0 0.0
    %829 = vmatpush1.msra.mxu0 %v579
    %830 = vmatprep.subr.mxu0 0.0
    %831 = vmatpush1.msra.mxu0 %v580
    %832 = vmatprep.subr.mxu0 0.0
    %833 = vmatpush1.msra.mxu0 0.0
    %834 = vmatprep.subr.mxu0 0.0
    %835 = vmatpush1.msra.mxu0 0.0
    %836 = vmatprep.subr.mxu0 0.0
    %837 = vmatpush1.msra.mxu0 0.0
    %838 = vmatprep.subr.mxu0 0.0
    %839 = vmatpush1.msra.mxu0 0.0
    %840 = vmatprep.subr.mxu0 0.0
    %841 = vmatpush1.msra.mxu0 0.0
    %842 = vmatprep.subr.mxu0 0.0
    %843 = vmatpush1.msra.mxu0 0.0
    %844 = vmatprep.subr.mxu0 0.0
    %845 = vmatpush1.msra.mxu0 0.0
    %846 = vmatprep.subr.mxu0 0.0
    %847 = vmatpush1.msra.mxu0 0.0
    %848 = vmatprep.subr.mxu0 0.0
    %849 = vmatpush1.msra.mxu0 0.0
    %850 = vmatprep.subr.mxu0 0.0
    %851 = vmatpush1.msra.mxu0 0.0
    %852 = vmatprep.subr.mxu0 0.0
    %853 = vmatpush1.msra.mxu0 0.0
    %854 = vmatprep.subr.mxu0 0.0
    %855 = vmatpush1.msra.mxu0 0.0
    %856 = vmatprep.subr.mxu0 0.0
    %857 = vmatpush1.msra.mxu0 0.0
    %858 = vmatprep.subr.mxu0 0.0
    %859 = vmatpush1.msra.mxu0 0.0
    %860 = vmatprep.subr.mxu0 0.0
    %861 = vmatpush1.msra.mxu0 0.0
    %862 = vmatprep.subr.mxu0 0.0
    %863 = vmatpush1.msra.mxu0 0.0
    %864 = vmatprep.mubr.f32.mxu0 0.0
    %865 = vmatmul.mubr.f32.gmra.mrb[0].mxu0 %v798
    %v866 = vpop.f32.mrb[0].mxu0
    %v867 = vadd.f32 0.0, %v866
    %v868 = vpop.f32.mrb[0].mxu0
    %869 = vdwg.mxu0
    %v870 = vadd.f32 %v542, %v867
    %v871 = vtanh.pop %v870
    %872 = vst [vmem:[#allocation2 + $0x18] sm:$0xff] %v871
    %873 = vmatprep.subr.mxu0 0.0
    %874 = vmatpush1.msra.mxu0 %v565
    %875 = vmatprep.subr.mxu0 0.0
    %876 = vmatpush1.msra.mxu0 %v566
    %877 = vmatprep.subr.mxu0 0.0
    %878 = vmatpush1.msra.mxu0 %v567
    %879 = vmatprep.subr.mxu0 0.0
    %880 = vmatpush1.msra.mxu0 %v568
    %881 = vmatprep.subr.mxu0 0.0
    %882 = vmatpush1.msra.mxu0 %v569
    %883 = vmatprep.subr.mxu0 0.0
    %884 = vmatpush1.msra.mxu0 %v570
    %885 = vmatprep.subr.mxu0 0.0
    %886 = vmatpush1.msra.mxu0 %v571
    %887 = vmatprep.subr.mxu0 0.0
    %888 = vmatpush1.msra.mxu0 %v572
    %889 = vmatprep.subr.mxu0 0.0
    %890 = vmatpush1.msra.mxu0 %v573
    %891 = vmatprep.subr.mxu0 0.0
    %892 = vmatpush1.msra.mxu0 %v574
    %893 = vmatprep.subr.mxu0 0.0
    %894 = vmatpush1.msra.mxu0 %v575
    %895 = vmatprep.subr.mxu0 0.0
    %896 = vmatpush1.msra.mxu0 %v576
    %897 = vmatprep.subr.mxu0 0.0
    %898 = vmatpush1.msra.mxu0 %v577
    %899 = vmatprep.subr.mxu0 0.0
    %900 = vmatpush1.msra.mxu0 %v578
    %901 = vmatprep.subr.mxu0 0.0
    %902 = vmatpush1.msra.mxu0 %v579
    %903 = vmatprep.subr.mxu0 0.0
    %904 = vmatpush1.msra.mxu0 %v580
    %905 = vmatprep.subr.mxu0 0.0
    %906 = vmatpush1.msra.mxu0 0.0
    %907 = vmatprep.subr.mxu0 0.0
    %908 = vmatpush1.msra.mxu0 0.0
    %909 = vmatprep.subr.mxu0 0.0
    %910 = vmatpush1.msra.mxu0 0.0
    %911 = vmatprep.subr.mxu0 0.0
    %912 = vmatpush1.msra.mxu0 0.0
    %913 = vmatprep.subr.mxu0 0.0
    %914 = vmatpush1.msra.mxu0 0.0
    %915 = vmatprep.subr.mxu0 0.0
    %916 = vmatpush1.msra.mxu0 0.0
    %917 = vmatprep.subr.mxu0 0.0
    %918 = vmatpush1.msra.mxu0 0.0
    %919 = vmatprep.subr.mxu0 0.0
    %920 = vmatpush1.msra.mxu0 0.0
    %921 = vmatprep.subr.mxu0 0.0
    %922 = vmatpush1.msra.mxu0 0.0
    %923 = vmatprep.subr.mxu0 0.0
    %924 = vmatpush1.msra.mxu0 0.0
    %925 = vmatprep.subr.mxu0 0.0
    %926 = vmatpush1.msra.mxu0 0.0
    %927 = vmatprep.subr.mxu0 0.0
    %928 = vmatpush1.msra.mxu0 0.0
    %929 = vmatprep.subr.mxu0 0.0
    %930 = vmatpush1.msra.mxu0 0.0
    %931 = vmatprep.subr.mxu0 0.0
    %932 = vmatpush1.msra.mxu0 0.0
    %933 = vmatprep.subr.mxu0 0.0
    %934 = vmatpush1.msra.mxu0 0.0
    %935 = vmatprep.subr.mxu0 0.0
    %936 = vmatpush1.msra.mxu0 0.0
    %937 = vmatprep.mubr.f32.mxu0 0.0
    %938 = vmatmul.mubr.f32.gmra.mrb[0].mxu0 %v871
    %v939 = vpop.f32.mrb[0].mxu0
    %v940 = vadd.f32 0.0, %v939
    %v941 = vpop.f32.mrb[0].mxu0
    %942 = vdwg.mxu0
    %v943 = vadd.f32 %v547, %v940
    %v944 = vtanh.pop %v943
    %945 = vst [vmem:[#allocation2 + $0x20] sm:$0xff] %v944
    %946 = vmatprep.subr.mxu0 0.0
    %947 = vmatpush1.msra.mxu0 %v565
    %948 = vmatprep.subr.mxu0 0.0
    %949 = vmatpush1.msra.mxu0 %v566
    %950 = vmatprep.subr.mxu0 0.0
    %951 = vmatpush1.msra.mxu0 %v567
    %952 = vmatprep.subr.mxu0 0.0
    %953 = vmatpush1.msra.mxu0 %v568
    %954 = vmatprep.subr.mxu0 0.0
    %955 = vmatpush1.msra.mxu0 %v569
    %956 = vmatprep.subr.mxu0 0.0
    %957 = vmatpush1.msra.mxu0 %v570
    %958 = vmatprep.subr.mxu0 0.0
    %959 = vmatpush1.msra.mxu0 %v571
    %960 = vmatprep.subr.mxu0 0.0
    %961 = vmatpush1.msra.mxu0 %v572
    %962 = vmatprep.subr.mxu0 0.0
    %963 = vmatpush1.msra.mxu0 %v573
    %964 = vmatprep.subr.mxu0 0.0
    %965 = vmatpush1.msra.mxu0 %v574
    %966 = vmatprep.subr.mxu0 0.0
    %967 = vmatpush1.msra.mxu0 %v575
    %968 = vmatprep.subr.mxu0 0.0
    %969 = vmatpush1.msra.mxu0 %v576
    %970 = vmatprep.subr.mxu0 0.0
    %971 = vmatpush1.msra.mxu0 %v577
    %972 = vmatprep.subr.mxu0 0.0
    %973 = vmatpush1.msra.mxu0 %v578
    %974 = vmatprep.subr.mxu0 0.0
    %975 = vmatpush1.msra.mxu0 %v579
    %976 = vmatprep.subr.mxu0 0.0
    %977 = vmatpush1.msra.mxu0 %v580
    %978 = vmatprep.subr.mxu0 0.0
    %979 = vmatpush1.msra.mxu0 0.0
    %980 = vmatprep.subr.mxu0 0.0
    %981 = vmatpush1.msra.mxu0 0.0
    %982 = vmatprep.subr.mxu0 0.0
    %983 = vmatpush1.msra.mxu0 0.0
    %984 = vmatprep.subr.mxu0 0.0
    %985 = vmatpush1.msra.mxu0 0.0
    %986 = vmatprep.subr.mxu0 0.0
    %987 = vmatpush1.msra.mxu0 0.0
    %988 = vmatprep.subr.mxu0 0.0
    %989 = vmatpush1.msra.mxu0 0.0
    %990 = vmatprep.subr.mxu0 0.0
    %991 = vmatpush1.msra.mxu0 0.0
    %992 = vmatprep.subr.mxu0 0.0
    %993 = vmatpush1.msra.mxu0 0.0
    %994 = vmatprep.subr.mxu0 0.0
    %995 = vmatpush1.msra.mxu0 0.0
    %996 = vmatprep.subr.mxu0 0.0
    %997 = vmatpush1.msra.mxu0 0.0
    %998 = vmatprep.subr.mxu0 0.0
    %999 = vmatpush1.msra.mxu0 0.0
    %1000 = vmatprep.subr.mxu0 0.0
    %1001 = vmatpush1.msra.mxu0 0.0
    %1002 = vmatprep.subr.mxu0 0.0
    %1003 = vmatpush1.msra.mxu0 0.0
    %1004 = vmatprep.subr.mxu0 0.0
    %1005 = vmatpush1.msra.mxu0 0.0
    %1006 = vmatprep.subr.mxu0 0.0
    %1007 = vmatpush1.msra.mxu0 0.0
    %1008 = vmatprep.subr.mxu0 0.0
    %1009 = vmatpush1.msra.mxu0 0.0
    %1010 = vmatprep.mubr.f32.mxu0 0.0
    %1011 = vmatmul.mubr.f32.gmra.mrb[0].mxu0 %v944
    %v1012 = vpop.f32.mrb[0].mxu0
    %v1013 = vadd.f32 0.0, %v1012
    %v1014 = vpop.f32.mrb[0].mxu0
    %1015 = vdwg.mxu0
    %v1016 = vadd.f32 %v552, %v1013
    %v1017 = vtanh.pop %v1016
    %1018 = vst [vmem:[#allocation2 + $0x28] sm:$0xff] %v1017
    %1019 = vmatprep.subr.mxu0 0.0
    %1020 = vmatpush1.msra.mxu0 %v565
    %1021 = vmatprep.subr.mxu0 0.0
    %1022 = vmatpush1.msra.mxu0 %v566
    %1023 = vmatprep.subr.mxu0 0.0
    %1024 = vmatpush1.msra.mxu0 %v567
    %1025 = vmatprep.subr.mxu0 0.0
    %1026 = vmatpush1.msra.mxu0 %v568
    %1027 = vmatprep.subr.mxu0 0.0
    %1028 = vmatpush1.msra.mxu0 %v569
    %1029 = vmatprep.subr.mxu0 0.0
    %1030 = vmatpush1.msra.mxu0 %v570
    %1031 = vmatprep.subr.mxu0 0.0
    %1032 = vmatpush1.msra.mxu0 %v571
    %1033 = vmatprep.subr.mxu0 0.0
    %1034 = vmatpush1.msra.mxu0 %v572
    %1035 = vmatprep.subr.mxu0 0.0
    %1036 = vmatpush1.msra.mxu0 %v573
    %1037 = vmatprep.subr.mxu0 0.0
    %1038 = vmatpush1.msra.mxu0 %v574
    %1039 = vmatprep.subr.mxu0 0.0
    %1040 = vmatpush1.msra.mxu0 %v575
    %1041 = vmatprep.subr.mxu0 0.0
    %1042 = vmatpush1.msra.mxu0 %v576
    %1043 = vmatprep.subr.mxu0 0.0
    %1044 = vmatpush1.msra.mxu0 %v577
    %1045 = vmatprep.subr.mxu0 0.0
    %1046 = vmatpush1.msra.mxu0 %v578
    %1047 = vmatprep.subr.mxu0 0.0
    %1048 = vmatpush1.msra.mxu0 %v579
    %1049 = vmatprep.subr.mxu0 0.0
    %1050 = vmatpush1.msra.mxu0 %v580
    %1051 = vmatprep.subr.mxu0 0.0
    %1052 = vmatpush1.msra.mxu0 0.0
    %1053 = vmatprep.subr.mxu0 0.0
    %1054 = vmatpush1.msra.mxu0 0.0
    %1055 = vmatprep.subr.mxu0 0.0
    %1056 = vmatpush1.msra.mxu0 0.0
    %1057 = vmatprep.subr.mxu0 0.0
    %1058 = vmatpush1.msra.mxu0 0.0
    %1059 = vmatprep.subr.mxu0 0.0
    %1060 = vmatpush1.msra.mxu0 0.0
    %1061 = vmatprep.subr.mxu0 0.0
    %1062 = vmatpush1.msra.mxu0 0.0
    %1063 = vmatprep.subr.mxu0 0.0
    %1064 = vmatpush1.msra.mxu0 0.0
    %1065 = vmatprep.subr.mxu0 0.0
    %1066 = vmatpush1.msra.mxu0 0.0
    %1067 = vmatprep.subr.mxu0 0.0
    %1068 = vmatpush1.msra.mxu0 0.0
    %1069 = vmatprep.subr.mxu0 0.0
    %1070 = vmatpush1.msra.mxu0 0.0
    %1071 = vmatprep.subr.mxu0 0.0
    %1072 = vmatpush1.msra.mxu0 0.0
    %1073 = vmatprep.subr.mxu0 0.0
    %1074 = vmatpush1.msra.mxu0 0.0
    %1075 = vmatprep.subr.mxu0 0.0
    %1076 = vmatpush1.msra.mxu0 0.0
    %1077 = vmatprep.subr.mxu0 0.0
    %1078 = vmatpush1.msra.mxu0 0.0
    %1079 = vmatprep.subr.mxu0 0.0
    %1080 = vmatpush1.msra.mxu0 0.0
    %1081 = vmatprep.subr.mxu0 0.0
    %1082 = vmatpush1.msra.mxu0 0.0
    %1083 = vmatprep.mubr.f32.mxu0 0.0
    %1084 = vmatmul.mubr.f32.gmra.mrb[0].mxu0 %v1017
    %v1085 = vpop.f32.mrb[0].mxu0
    %v1086 = vadd.f32 0.0, %v1085
    %v1087 = vpop.f32.mrb[0].mxu0
    %1088 = vdwg.mxu0
    %v1089 = vadd.f32 %v557, %v1086
    %v1090 = vtanh.pop %v1089
    %1091 = vst [vmem:[#allocation2 + $0x30] sm:$0xff] %v1090
    %1092 = vmatprep.subr.mxu0 0.0
    %1093 = vmatpush1.msra.mxu0 %v565
    %1094 = vmatprep.subr.mxu0 0.0
    %1095 = vmatpush1.msra.mxu0 %v566
    %1096 = vmatprep.subr.mxu0 0.0
    %1097 = vmatpush1.msra.mxu0 %v567
    %1098 = vmatprep.subr.mxu0 0.0
    %1099 = vmatpush1.msra.mxu0 %v568
    %1100 = vmatprep.subr.mxu0 0.0
    %1101 = vmatpush1.msra.mxu0 %v569
    %1102 = vmatprep.subr.mxu0 0.0
    %1103 = vmatpush1.msra.mxu0 %v570
    %1104 = vmatprep.subr.mxu0 0.0
    %1105 = vmatpush1.msra.mxu0 %v571
    %1106 = vmatprep.subr.mxu0 0.0
    %1107 = vmatpush1.msra.mxu0 %v572
    %1108 = vmatprep.subr.mxu0 0.0
    %1109 = vmatpush1.msra.mxu0 %v573
    %1110 = vmatprep.subr.mxu0 0.0
    %1111 = vmatpush1.msra.mxu0 %v574
    %1112 = vmatprep.subr.mxu0 0.0
    %1113 = vmatpush1.msra.mxu0 %v575
    %1114 = vmatprep.subr.mxu0 0.0
    %1115 = vmatpush1.msra.mxu0 %v576
    %1116 = vmatprep.subr.mxu0 0.0
    %1117 = vmatpush1.msra.mxu0 %v577
    %1118 = vmatprep.subr.mxu0 0.0
    %1119 = vmatpush1.msra.mxu0 %v578
    %1120 = vmatprep.subr.mxu0 0.0
    %1121 = vmatpush1.msra.mxu0 %v579
    %1122 = vmatprep.subr.mxu0 0.0
    %1123 = vmatpush1.msra.mxu0 %v580
    %1124 = vmatprep.subr.mxu0 0.0
    %1125 = vmatpush1.msra.mxu0 0.0
    %1126 = vmatprep.subr.mxu0 0.0
    %1127 = vmatpush1.msra.mxu0 0.0
    %1128 = vmatprep.subr.mxu0 0.0
    %1129 = vmatpush1.msra.mxu0 0.0
    %1130 = vmatprep.subr.mxu0 0.0
    %1131 = vmatpush1.msra.mxu0 0.0
    %1132 = vmatprep.subr.mxu0 0.0
    %1133 = vmatpush1.msra.mxu0 0.0
    %1134 = vmatprep.subr.mxu0 0.0
    %1135 = vmatpush1.msra.mxu0 0.0
    %1136 = vmatprep.subr.mxu0 0.0
    %1137 = vmatpush1.msra.mxu0 0.0
    %1138 = vmatprep.subr.mxu0 0.0
    %1139 = vmatpush1.msra.mxu0 0.0
    %1140 = vmatprep.subr.mxu0 0.0
    %1141 = vmatpush1.msra.mxu0 0.0
    %1142 = vmatprep.subr.mxu0 0.0
    %1143 = vmatpush1.msra.mxu0 0.0
    %1144 = vmatprep.subr.mxu0 0.0
    %1145 = vmatpush1.msra.mxu0 0.0
    %1146 = vmatprep.subr.mxu0 0.0
    %1147 = vmatpush1.msra.mxu0 0.0
    %1148 = vmatprep.subr.mxu0 0.0
    %1149 = vmatpush1.msra.mxu0 0.0
    %1150 = vmatprep.subr.mxu0 0.0
    %1151 = vmatpush1.msra.mxu0 0.0
    %1152 = vmatprep.subr.mxu0 0.0
    %1153 = vmatpush1.msra.mxu0 0.0
    %1154 = vmatprep.subr.mxu0 0.0
    %1155 = vmatpush1.msra.mxu0 0.0
    %1156 = vmatprep.mubr.f32.mxu0 0.0
    %1157 = vmatmul.mubr.f32.gmra.mrb[0].mxu0 %v1090
    %v1158 = vpop.f32.mrb[0].mxu0
    %v1159 = vadd.f32 0.0, %v1158
    %v1160 = vpop.f32.mrb[0].mxu0
    %1161 = vdwg.mxu0
    %v1162 = vadd.f32 %v562, %v1159
    %v1163 = vtanh.pop %v1162
    %1164 = vst [vmem:[#allocation2 + $0x38] sm:$0xff] %v1163
    %v1165 = vld [vmem:[#allocation2] sm:$0xff]
    %v1166 = vld [vmem:[#allocation2 + $0x8] sm:$0xff]
    %v1167 = vld [vmem:[#allocation2 + $0x10] sm:$0xff]
    %v1168 = vld [vmem:[#allocation2 + $0x18] sm:$0xff]
    %v1169 = vld [vmem:[#allocation2 + $0x20] sm:$0xff]
    %v1170 = vld [vmem:[#allocation2 + $0x28] sm:$0xff]
    %v1171 = vld [vmem:[#allocation2 + $0x30] sm:$0xff]
    %v1172 = vld [vmem:[#allocation2 + $0x38] sm:$0xff]
    %v1173 = vld [vmem:[#allocation6 + $0x280] sm:$0xff]
    %v1174 = vld [vmem:[#allocation6 + $0x288] sm:$0xff]
    %v1175 = vld [vmem:[#allocation6 + $0x290] sm:$0xff]
    %v1176 = vld [vmem:[#allocation6 + $0x298] sm:$0xff]
    %v1177 = vld [vmem:[#allocation6 + $0x2a0] sm:$0xff]
    %v1178 = vld [vmem:[#allocation6 + $0x2a8] sm:$0xff]
    %v1179 = vld [vmem:[#allocation6 + $0x2b0] sm:$0xff]
    %v1180 = vld [vmem:[#allocation6 + $0x2b8] sm:$0xff]
    %v1181 = vld [vmem:[#allocation6 + $0x2c0] sm:$0xff]
    %v1182 = vld [vmem:[#allocation6 + $0x2c8] sm:$0xff]
    %v1183 = vld [vmem:[#allocation6 + $0x2d0] sm:$0xff]
    %v1184 = vld [vmem:[#allocation6 + $0x2d8] sm:$0xff]
    %v1185 = vld [vmem:[#allocation6 + $0x2e0] sm:$0xff]
    %v1186 = vld [vmem:[#allocation6 + $0x2e8] sm:$0xff]
    %v1187 = vld [vmem:[#allocation6 + $0x2f0] sm:$0xff]
    %v1188 = vld [vmem:[#allocation6 + $0x2f8] sm:$0xff]
    %v1189 = vlaneseq
    %v1190 = vshrl.u32 %v1189, 7
    %v1191 = vsub.s32 4, %v1190
    %v1192 = vrot.slane %v40, %v1191
    %1193 = vmatprep.subr.mxu0 0.0
    %1194 = vmatpush1.msra.mxu0 %v1173
    %1195 = vmatprep.subr.mxu0 0.0
    %1196 = vmatpush1.msra.mxu0 %v1174
    %1197 = vmatprep.subr.mxu0 0.0
    %1198 = vmatpush1.msra.mxu0 %v1175
    %1199 = vmatprep.subr.mxu0 0.0
    %1200 = vmatpush1.msra.mxu0 %v1176
    %1201 = vmatprep.subr.mxu0 0.0
    %1202 = vmatpush1.msra.mxu0 %v1177
    %1203 = vmatprep.subr.mxu0 0.0
    %1204 = vmatpush1.msra.mxu0 %v1178
    %1205 = vmatprep.subr.mxu0 0.0
    %1206 = vmatpush1.msra.mxu0 %v1179
    %1207 = vmatprep.subr.mxu0 0.0
    %1208 = vmatpush1.msra.mxu0 %v1180
    %1209 = vmatprep.subr.mxu0 0.0
    %1210 = vmatpush1.msra.mxu0 %v1181
    %1211 = vmatprep.subr.mxu0 0.0
    %1212 = vmatpush1.msra.mxu0 %v1182
    %1213 = vmatprep.subr.mxu0 0.0
    %1214 = vmatpush1.msra.mxu0 %v1183
    %1215 = vmatprep.subr.mxu0 0.0
    %1216 = vmatpush1.msra.mxu0 %v1184
    %1217 = vmatprep.subr.mxu0 0.0
    %1218 = vmatpush1.msra.mxu0 %v1185
    %1219 = vmatprep.subr.mxu0 0.0
    %1220 = vmatpush1.msra.mxu0 %v1186
    %1221 = vmatprep.subr.mxu0 0.0
    %1222 = vmatpush1.msra.mxu0 %v1187
    %1223 = vmatprep.subr.mxu0 0.0
    %1224 = vmatpush1.msra.mxu0 %v1188
    %1225 = vmatprep.subr.mxu0 0.0
    %1226 = vmatpush1.msra.mxu0 0.0
    %1227 = vmatprep.subr.mxu0 0.0
    %1228 = vmatpush1.msra.mxu0 0.0
    %1229 = vmatprep.subr.mxu0 0.0
    %1230 = vmatpush1.msra.mxu0 0.0
    %1231 = vmatprep.subr.mxu0 0.0
    %1232 = vmatpush1.msra.mxu0 0.0
    %1233 = vmatprep.subr.mxu0 0.0
    %1234 = vmatpush1.msra.mxu0 0.0
    %1235 = vmatprep.subr.mxu0 0.0
    %1236 = vmatpush1.msra.mxu0 0.0
    %1237 = vmatprep.subr.mxu0 0.0
    %1238 = vmatpush1.msra.mxu0 0.0
    %1239 = vmatprep.subr.mxu0 0.0
    %1240 = vmatpush1.msra.mxu0 0.0
    %1241 = vmatprep.subr.mxu0 0.0
    %1242 = vmatpush1.msra.mxu0 0.0
    %1243 = vmatprep.subr.mxu0 0.0
    %1244 = vmatpush1.msra.mxu0 0.0
    %1245 = vmatprep.subr.mxu0 0.0
    %1246 = vmatpush1.msra.mxu0 0.0
    %1247 = vmatprep.subr.mxu0 0.0
    %1248 = vmatpush1.msra.mxu0 0.0
    %1249 = vmatprep.subr.mxu0 0.0
    %1250 = vmatpush1.msra.mxu0 0.0
    %1251 = vmatprep.subr.mxu0 0.0
    %1252 = vmatpush1.msra.mxu0 0.0
    %1253 = vmatprep.subr.mxu0 0.0
    %1254 = vmatpush1.msra.mxu0 0.0
    %1255 = vmatprep.subr.mxu0 0.0
    %1256 = vmatpush1.msra.mxu0 0.0
    %1257 = vmatprep.mubr.f32.mxu0 0.0
    %1258 = vmatmul.mubr.f32.gmra.mrb[0].mxu0 %v1165
    %v1259 = vpop.f32.mrb[0].mxu0
    %v1260 = vadd.f32 %v1192, %v1259
    %v1261 = vpop.f32.mrb[0].mxu0
    %1262 = vmatprep.mubr.f32.mxu0 0.0
    %1263 = vmatmul.mubr.f32.gmra.mrb[0].mxu0 %v1166
    %v1264 = vpop.f32.mrb[0].mxu0
    %v1265 = vadd.f32 %v1192, %v1264
    %v1266 = vpop.f32.mrb[0].mxu0
    %1267 = vmatprep.mubr.f32.mxu0 0.0
    %1268 = vmatmul.mubr.f32.gmra.mrb[0].mxu0 %v1167
    %v1269 = vpop.f32.mrb[0].mxu0
    %v1270 = vadd.f32 %v1192, %v1269
    %v1271 = vpop.f32.mrb[0].mxu0
    %1272 = vmatprep.mubr.f32.mxu0 0.0
    %1273 = vmatmul.mubr.f32.gmra.mrb[0].mxu0 %v1168
    %v1274 = vpop.f32.mrb[0].mxu0
    %v1275 = vadd.f32 %v1192, %v1274
    %v1276 = vpop.f32.mrb[0].mxu0
    %1277 = vmatprep.mubr.f32.mxu0 0.0
    %1278 = vmatmul.mubr.f32.gmra.mrb[0].mxu0 %v1169
    %v1279 = vpop.f32.mrb[0].mxu0
    %v1280 = vadd.f32 %v1192, %v1279
    %v1281 = vpop.f32.mrb[0].mxu0
    %1282 = vmatprep.mubr.f32.mxu0 0.0
    %1283 = vmatmul.mubr.f32.gmra.mrb[0].mxu0 %v1170
    %v1284 = vpop.f32.mrb[0].mxu0
    %v1285 = vadd.f32 %v1192, %v1284
    %v1286 = vpop.f32.mrb[0].mxu0
    %1287 = vmatprep.mubr.f32.mxu0 0.0
    %1288 = vmatmul.mubr.f32.gmra.mrb[0].mxu0 %v1171
    %v1289 = vpop.f32.mrb[0].mxu0
    %v1290 = vadd.f32 %v1192, %v1289
    %v1291 = vpop.f32.mrb[0].mxu0
    %1292 = vmatprep.mubr.f32.mxu0 0.0
    %1293 = vmatmul.mubr.f32.gmra.mrb[0].mxu0 %v1172
    %v1294 = vpop.f32.mrb[0].mxu0
    %v1295 = vadd.f32 %v1192, %v1294
    %v1296 = vpop.f32.mrb[0].mxu0
    %1297 = vdwg.mxu0
    %v1298 = vtanh.pop %v1260
    %v1299 = vtanh.pop %v1265
    %v1300 = vtanh.pop %v1270
    %v1301 = vtanh.pop %v1275
    %v1302 = vtanh.pop %v1280
    %v1303 = vtanh.pop %v1285
    %v1304 = vtanh.pop %v1290
    %v1305 = vtanh.pop %v1295
    %v1306 = vld [vmem:[#allocation6 + $0x300] sm:$0xff]
    %v1307 = vld [vmem:[#allocation6 + $0x308] sm:$0xff]
    %v1308 = vld [vmem:[#allocation6 + $0x310] sm:$0xff]
    %v1309 = vld [vmem:[#allocation6 + $0x318] sm:$0xff]
    %v1310 = vld [vmem:[#allocation6 + $0x320] sm:$0xff]
    %v1311 = vld [vmem:[#allocation6 + $0x328] sm:$0xff]
    %v1312 = vld [vmem:[#allocation6 + $0x330] sm:$0xff]
    %v1313 = vld [vmem:[#allocation6 + $0x338] sm:$0xff]
    %v1314 = vld [vmem:[#allocation6 + $0x340] sm:$0xff]
    %v1315 = vld [vmem:[#allocation6 + $0x348] sm:$0xff]
    %v1316 = vld [vmem:[#allocation6 + $0x350] sm:$0xff]
    %v1317 = vld [vmem:[#allocation6 + $0x358] sm:$0xff]
    %v1318 = vld [vmem:[#allocation6 + $0x360] sm:$0xff]
    %v1319 = vld [vmem:[#allocation6 + $0x368] sm:$0xff]
    %v1320 = vld [vmem:[#allocation6 + $0x370] sm:$0xff]
    %v1321 = vld [vmem:[#allocation6 + $0x378] sm:$0xff]
    %v1322 = vlaneseq
    %v1323 = vshrl.u32 %v1322, 7
    %v1324 = vsub.s32 5, %v1323
    %v1325 = vrot.slane %v40, %v1324
    %1326 = vmatprep.subr.mxu0 0.0
    %1327 = vmatpush1.msra.mxu0 %v1306
    %1328 = vmatprep.subr.mxu0 0.0
    %1329 = vmatpush1.msra.mxu0 %v1307
    %1330 = vmatprep.subr.mxu0 0.0
    %1331 = vmatpush1.msra.mxu0 %v1308
    %1332 = vmatprep.subr.mxu0 0.0
    %1333 = vmatpush1.msra.mxu0 %v1309
    %1334 = vmatprep.subr.mxu0 0.0
    %1335 = vmatpush1.msra.mxu0 %v1310
    %1336 = vmatprep.subr.mxu0 0.0
    %1337 = vmatpush1.msra.mxu0 %v1311
    %1338 = vmatprep.subr.mxu0 0.0
    %1339 = vmatpush1.msra.mxu0 %v1312
    %1340 = vmatprep.subr.mxu0 0.0
    %1341 = vmatpush1.msra.mxu0 %v1313
    %1342 = vmatprep.subr.mxu0 0.0
    %1343 = vmatpush1.msra.mxu0 %v1314
    %1344 = vmatprep.subr.mxu0 0.0
    %1345 = vmatpush1.msra.mxu0 %v1315
    %1346 = vmatprep.subr.mxu0 0.0
    %1347 = vmatpush1.msra.mxu0 %v1316
    %1348 = vmatprep.subr.mxu0 0.0
    %1349 = vmatpush1.msra.mxu0 %v1317
    %1350 = vmatprep.subr.mxu0 0.0
    %1351 = vmatpush1.msra.mxu0 %v1318
    %1352 = vmatprep.subr.mxu0 0.0
    %1353 = vmatpush1.msra.mxu0 %v1319
    %1354 = vmatprep.subr.mxu0 0.0
    %1355 = vmatpush1.msra.mxu0 %v1320
    %1356 = vmatprep.subr.mxu0 0.0
    %1357 = vmatpush1.msra.mxu0 %v1321
    %1358 = vmatprep.subr.mxu0 0.0
    %1359 = vmatpush1.msra.mxu0 0.0
    %1360 = vmatprep.subr.mxu0 0.0
    %1361 = vmatpush1.msra.mxu0 0.0
    %1362 = vmatprep.subr.mxu0 0.0
    %1363 = vmatpush1.msra.mxu0 0.0
    %1364 = vmatprep.subr.mxu0 0.0
    %1365 = vmatpush1.msra.mxu0 0.0
    %1366 = vmatprep.subr.mxu0 0.0
    %1367 = vmatpush1.msra.mxu0 0.0
    %1368 = vmatprep.subr.mxu0 0.0
    %1369 = vmatpush1.msra.mxu0 0.0
    %1370 = vmatprep.subr.mxu0 0.0
    %1371 = vmatpush1.msra.mxu0 0.0
    %1372 = vmatprep.subr.mxu0 0.0
    %1373 = vmatpush1.msra.mxu0 0.0
    %1374 = vmatprep.subr.mxu0 0.0
    %1375 = vmatpush1.msra.mxu0 0.0
    %1376 = vmatprep.subr.mxu0 0.0
    %1377 = vmatpush1.msra.mxu0 0.0
    %1378 = vmatprep.subr.mxu0 0.0
    %1379 = vmatpush1.msra.mxu0 0.0
    %1380 = vmatprep.subr.mxu0 0.0
    %1381 = vmatpush1.msra.mxu0 0.0
    %1382 = vmatprep.subr.mxu0 0.0
    %1383 = vmatpush1.msra.mxu0 0.0
    %1384 = vmatprep.subr.mxu0 0.0
    %1385 = vmatpush1.msra.mxu0 0.0
    %1386 = vmatprep.subr.mxu0 0.0
    %1387 = vmatpush1.msra.mxu0 0.0
    %1388 = vmatprep.subr.mxu0 0.0
    %1389 = vmatpush1.msra.mxu0 0.0
    %1390 = vmatprep.mubr.f32.mxu0 0.0
    %1391 = vmatmul.mubr.f32.gmra.mrb[0].mxu0 %v1298
    %v1392 = vpop.f32.mrb[0].mxu0
    %v1393 = vadd.f32 %v1325, %v1392
    %v1394 = vpop.f32.mrb[0].mxu0
    %1395 = vmatprep.mubr.f32.mxu0 0.0
    %1396 = vmatmul.mubr.f32.gmra.mrb[0].mxu0 %v1299
    %v1397 = vpop.f32.mrb[0].mxu0
    %v1398 = vadd.f32 %v1325, %v1397
    %v1399 = vpop.f32.mrb[0].mxu0
    %1400 = vmatprep.mubr.f32.mxu0 0.0
    %1401 = vmatmul.mubr.f32.gmra.mrb[0].mxu0 %v1300
    %v1402 = vpop.f32.mrb[0].mxu0
    %v1403 = vadd.f32 %v1325, %v1402
    %v1404 = vpop.f32.mrb[0].mxu0
    %1405 = vmatprep.mubr.f32.mxu0 0.0
    %1406 = vmatmul.mubr.f32.gmra.mrb[0].mxu0 %v1301
    %v1407 = vpop.f32.mrb[0].mxu0
    %v1408 = vadd.f32 %v1325, %v1407
    %v1409 = vpop.f32.mrb[0].mxu0
    %1410 = vmatprep.mubr.f32.mxu0 0.0
    %1411 = vmatmul.mubr.f32.gmra.mrb[0].mxu0 %v1302
    %v1412 = vpop.f32.mrb[0].mxu0
    %v1413 = vadd.f32 %v1325, %v1412
    %v1414 = vpop.f32.mrb[0].mxu0
    %1415 = vmatprep.mubr.f32.mxu0 0.0
    %1416 = vmatmul.mubr.f32.gmra.mrb[0].mxu0 %v1303
    %v1417 = vpop.f32.mrb[0].mxu0
    %v1418 = vadd.f32 %v1325, %v1417
    %v1419 = vpop.f32.mrb[0].mxu0
    %1420 = vmatprep.mubr.f32.mxu0 0.0
    %1421 = vmatmul.mubr.f32.gmra.mrb[0].mxu0 %v1304
    %v1422 = vpop.f32.mrb[0].mxu0
    %v1423 = vadd.f32 %v1325, %v1422
    %v1424 = vpop.f32.mrb[0].mxu0
    %1425 = vmatprep.mubr.f32.mxu0 0.0
    %1426 = vmatmul.mubr.f32.gmra.mrb[0].mxu0 %v1305
    %v1427 = vpop.f32.mrb[0].mxu0
    %v1428 = vadd.f32 %v1325, %v1427
    %v1429 = vpop.f32.mrb[0].mxu0
    %1430 = vdwg.mxu0
    %v1431 = vtanh.pop %v1393
    %v1432 = vtanh.pop %v1398
    %v1433 = vtanh.pop %v1403
    %v1434 = vtanh.pop %v1408
    %v1435 = vtanh.pop %v1413
    %v1436 = vtanh.pop %v1418
    %v1437 = vtanh.pop %v1423
    %v1438 = vtanh.pop %v1428
    %v1439 = vld [vmem:[#allocation6 + $0x380] sm:$0xff]
    %v1440 = vld [vmem:[#allocation6 + $0x388] sm:$0xff]
    %v1441 = vld [vmem:[#allocation6 + $0x390] sm:$0xff]
    %v1442 = vld [vmem:[#allocation6 + $0x398] sm:$0xff]
    %v1443 = vld [vmem:[#allocation6 + $0x3a0] sm:$0xff]
    %v1444 = vld [vmem:[#allocation6 + $0x3a8] sm:$0xff]
    %v1445 = vld [vmem:[#allocation6 + $0x3b0] sm:$0xff]
    %v1446 = vld [vmem:[#allocation6 + $0x3b8] sm:$0xff]
    %v1447 = vld [vmem:[#allocation6 + $0x3c0] sm:$0xff]
    %v1448 = vld [vmem:[#allocation6 + $0x3c8] sm:$0xff]
    %v1449 = vld [vmem:[#allocation6 + $0x3d0] sm:$0xff]
    %v1450 = vld [vmem:[#allocation6 + $0x3d8] sm:$0xff]
    %v1451 = vld [vmem:[#allocation6 + $0x3e0] sm:$0xff]
    %v1452 = vld [vmem:[#allocation6 + $0x3e8] sm:$0xff]
    %v1453 = vld [vmem:[#allocation6 + $0x3f0] sm:$0xff]
    %v1454 = vld [vmem:[#allocation6 + $0x3f8] sm:$0xff]
    %v1455 = vlaneseq
    %v1456 = vshrl.u32 %v1455, 7
    %v1457 = vsub.s32 6, %v1456
    %v1458 = vrot.slane %v40, %v1457
    %1459 = vmatprep.subr.mxu0 0.0
    %1460 = vmatpush1.msra.mxu0 %v1439
    %1461 = vmatprep.subr.mxu0 0.0
    %1462 = vmatpush1.msra.mxu0 %v1440
    %1463 = vmatprep.subr.mxu0 0.0
    %1464 = vmatpush1.msra.mxu0 %v1441
    %1465 = vmatprep.subr.mxu0 0.0
    %1466 = vmatpush1.msra.mxu0 %v1442
    %1467 = vmatprep.subr.mxu0 0.0
    %1468 = vmatpush1.msra.mxu0 %v1443
    %1469 = vmatprep.subr.mxu0 0.0
    %1470 = vmatpush1.msra.mxu0 %v1444
    %1471 = vmatprep.subr.mxu0 0.0
    %1472 = vmatpush1.msra.mxu0 %v1445
    %1473 = vmatprep.subr.mxu0 0.0
    %1474 = vmatpush1.msra.mxu0 %v1446
    %1475 = vmatprep.subr.mxu0 0.0
    %1476 = vmatpush1.msra.mxu0 %v1447
    %1477 = vmatprep.subr.mxu0 0.0
    %1478 = vmatpush1.msra.mxu0 %v1448
    %1479 = vmatprep.subr.mxu0 0.0
    %1480 = vmatpush1.msra.mxu0 %v1449
    %1481 = vmatprep.subr.mxu0 0.0
    %1482 = vmatpush1.msra.mxu0 %v1450
    %1483 = vmatprep.subr.mxu0 0.0
    %1484 = vmatpush1.msra.mxu0 %v1451
    %1485 = vmatprep.subr.mxu0 0.0
    %1486 = vmatpush1.msra.mxu0 %v1452
    %1487 = vmatprep.subr.mxu0 0.0
    %1488 = vmatpush1.msra.mxu0 %v1453
    %1489 = vmatprep.subr.mxu0 0.0
    %1490 = vmatpush1.msra.mxu0 %v1454
    %1491 = vmatprep.subr.mxu0 0.0
    %1492 = vmatpush1.msra.mxu0 0.0
    %1493 = vmatprep.subr.mxu0 0.0
    %1494 = vmatpush1.msra.mxu0 0.0
    %1495 = vmatprep.subr.mxu0 0.0
    %1496 = vmatpush1.msra.mxu0 0.0
    %1497 = vmatprep.subr.mxu0 0.0
    %1498 = vmatpush1.msra.mxu0 0.0
    %1499 = vmatprep.subr.mxu0 0.0
    %1500 = vmatpush1.msra.mxu0 0.0
    %1501 = vmatprep.subr.mxu0 0.0
    %1502 = vmatpush1.msra.mxu0 0.0
    %1503 = vmatprep.subr.mxu0 0.0
    %1504 = vmatpush1.msra.mxu0 0.0
    %1505 = vmatprep.subr.mxu0 0.0
    %1506 = vmatpush1.msra.mxu0 0.0
    %1507 = vmatprep.subr.mxu0 0.0
    %1508 = vmatpush1.msra.mxu0 0.0
    %1509 = vmatprep.subr.mxu0 0.0
    %1510 = vmatpush1.msra.mxu0 0.0
    %1511 = vmatprep.subr.mxu0 0.0
    %1512 = vmatpush1.msra.mxu0 0.0
    %1513 = vmatprep.subr.mxu0 0.0
    %1514 = vmatpush1.msra.mxu0 0.0
    %1515 = vmatprep.subr.mxu0 0.0
    %1516 = vmatpush1.msra.mxu0 0.0
    %1517 = vmatprep.subr.mxu0 0.0
    %1518 = vmatpush1.msra.mxu0 0.0
    %1519 = vmatprep.subr.mxu0 0.0
    %1520 = vmatpush1.msra.mxu0 0.0
    %1521 = vmatprep.subr.mxu0 0.0
    %1522 = vmatpush1.msra.mxu0 0.0
    %1523 = vmatprep.mubr.f32.mxu0 0.0
    %1524 = vmatmul.mubr.f32.gmra.mrb[0].mxu0 %v1431
    %v1525 = vpop.f32.mrb[0].mxu0
    %v1526 = vadd.f32 %v1458, %v1525
    %v1527 = vpop.f32.mrb[0].mxu0
    %1528 = vmatprep.mubr.f32.mxu0 0.0
    %1529 = vmatmul.mubr.f32.gmra.mrb[0].mxu0 %v1432
    %v1530 = vpop.f32.mrb[0].mxu0
    %v1531 = vadd.f32 %v1458, %v1530
    %v1532 = vpop.f32.mrb[0].mxu0
    %1533 = vmatprep.mubr.f32.mxu0 0.0
    %1534 = vmatmul.mubr.f32.gmra.mrb[0].mxu0 %v1433
    %v1535 = vpop.f32.mrb[0].mxu0
    %v1536 = vadd.f32 %v1458, %v1535
    %v1537 = vpop.f32.mrb[0].mxu0
    %1538 = vmatprep.mubr.f32.mxu0 0.0
    %1539 = vmatmul.mubr.f32.gmra.mrb[0].mxu0 %v1434
    %v1540 = vpop.f32.mrb[0].mxu0
    %v1541 = vadd.f32 %v1458, %v1540
    %v1542 = vpop.f32.mrb[0].mxu0
    %1543 = vmatprep.mubr.f32.mxu0 0.0
    %1544 = vmatmul.mubr.f32.gmra.mrb[0].mxu0 %v1435
    %v1545 = vpop.f32.mrb[0].mxu0
    %v1546 = vadd.f32 %v1458, %v1545
    %v1547 = vpop.f32.mrb[0].mxu0
    %1548 = vmatprep.mubr.f32.mxu0 0.0
    %1549 = vmatmul.mubr.f32.gmra.mrb[0].mxu0 %v1436
    %v1550 = vpop.f32.mrb[0].mxu0
    %v1551 = vadd.f32 %v1458, %v1550
    %v1552 = vpop.f32.mrb[0].mxu0
    %1553 = vmatprep.mubr.f32.mxu0 0.0
    %1554 = vmatmul.mubr.f32.gmra.mrb[0].mxu0 %v1437
    %v1555 = vpop.f32.mrb[0].mxu0
    %v1556 = vadd.f32 %v1458, %v1555
    %v1557 = vpop.f32.mrb[0].mxu0
    %1558 = vmatprep.mubr.f32.mxu0 0.0
    %1559 = vmatmul.mubr.f32.gmra.mrb[0].mxu0 %v1438
    %v1560 = vpop.f32.mrb[0].mxu0
    %v1561 = vadd.f32 %v1458, %v1560
    %v1562 = vpop.f32.mrb[0].mxu0
    %1563 = vdwg.mxu0
    %1564 = vst [vmem:[#allocation8] sm:$0xff] %v1526
    %1565 = vst [vmem:[#allocation8 + $0x8] sm:$0xff] %v1531
    %1566 = vst [vmem:[#allocation8 + $0x10] sm:$0xff] %v1536
    %1567 = vst [vmem:[#allocation8 + $0x18] sm:$0xff] %v1541
    %1568 = vst [vmem:[#allocation8 + $0x20] sm:$0xff] %v1546
    %1569 = vst [vmem:[#allocation8 + $0x28] sm:$0xff] %v1551
    %1570 = vst [vmem:[#allocation8 + $0x30] sm:$0xff] %v1556
    %1571 = vst [vmem:[#allocation8 + $0x38] sm:$0xff] %v1561
    // Predicated region
    $region18: #{tpu_custom_call.1} parent=1 // pred_check
      _
    $region19: #{tpu_custom_call.1} parent=1 // pred_check_branch
      %1573 = sbr.rel (0) target = $region21
    $region20: #{tpu_custom_call.1} parent=1 // pred_region
      %s1575 = ssub.s32 1024, 1024
      %1576 = vsyncadd [#allocation5], %s1575
      %s1577 = sshll.u32 [#allocation8], 4
      %s1578 = int_to_ptr.vmem [resolvable:$true] %s1577
      %1583 = dma.vmem_to_hbm [thread:$0]  %s1578, 1024, %s2, [#allocation5], 128, 128, 8
    $region21: #{tpu_custom_call.1} parent=1 // pred_fallthru
      _
    // Predicated region
    $region22: #{tpu_custom_call.1} parent=1 // pred_check
      _
    $region23: #{tpu_custom_call.1} parent=1 // pred_check_branch
      %1585 = sbr.rel (0) target = $region25
    $region24: #{tpu_custom_call.1} parent=1 // pred_region
      %1586 = dma.done [#allocation5], 1024
    $region25: #{tpu_custom_call.1} parent=1 // pred_fallthru
      _
    %1587 = vsyncpa [#allocation4], 1
    %1588 = vsyncpa [#allocation7], 1
    %1589 = vsyncpa [#allocation5], 1

</llo_original>
